<compile_context>
chip_gen: v7x
topology: tpu7x:2x2x1
jax: 0.10.0
libtpu: 0.0.40
codegen_flags: <defaults>
</compile_context>

<pallas_src>
import functools

import jax
import jax.numpy as jnp
import numpy as np
from jax.experimental import pallas as pl
from jax.experimental.pallas import tpu as pltpu

config = {"kernel_size": 3, "fc_layer_size": 32}
OUT_CLASSES = 10


# ----------------------------------------------------------------------------
# The single fused kernel.
# ----------------------------------------------------------------------------
def _basenet_kernel(xs_ref, wv1_ref, bv1_ref, rsel1_ref, csel1_ref,
                    wv2_ref, s2_ref, bv2_ref, g_ref, bfv1_ref,
                    wf2b_ref, bfv2_ref, o_ref, *, k, ho1, ho2, hp2):
    f32 = jnp.float32

    def conv_taps(slab, wv, ho):
        """Valid conv (stride 1) taps over a lane-packed slab.

        One (1, L) x (ho, L) VPU multiply-add per tap serves every packed
        (sample, channel) lane segment at once; `wv` holds the lane-replicated
        per-tap weights (one row per (kh, kw)).
        """
        width = wv.shape[1]
        acc = None
        for kh in range(k):
            for kw in range(k):
                t = kh * k + kw
                term = wv[t:t + 1, :] * slab[kh:kh + ho, kw:kw + width]
                acc = term if acc is None else acc + term
        return acc

    def pairwise_max(v):
        # 2x2 window max at every anchor of the packed slab; the stride-2
        # down-selection happens later in batched 0/1 matmuls / fc1 weights.
        cm = jnp.maximum(v[:, :-1], v[:, 1:])
        return jnp.maximum(cm[:-1, :], cm[1:, :])

    # ---- conv1 + bias + ReLU on the (H, N*C1*W) lane-packed slab ----
    y1 = jnp.maximum(conv_taps(xs_ref[...], wv1_ref[...], ho1) + bv1_ref[...], 0.0)

    # ---- pool1: pairwise maxes + 2 batched select matmuls (all samples/channels
    # at once); the column select also replicates each (n, ci) map across conv2's
    # output channels, directly producing conv2's (n, co2, ci)-packed input slab.
    rm1 = pairwise_max(y1)
    p1 = jnp.dot(jnp.dot(rsel1_ref[...], rm1, preferred_element_type=f32),
                 csel1_ref[...], preferred_element_type=f32)

    # ---- conv2 taps on the (n, co2, ci)-packed slab, then ONE matmul that sums
    # over input channels and compacts to (n, co2) segments; bias + ReLU ----
    acc2 = conv_taps(p1, wv2_ref[...], ho2)
    z2 = jnp.maximum(jnp.dot(acc2, s2_ref[...], preferred_element_type=f32)
                     + bv2_ref[...], 0.0)

    # ---- pool2 pairwise maxes; stride-2 row/col selection is folded into the
    # fc1 weight slabs (g_ref), so flatten + pool2-select + fc1 is hp2 matmuls
    # over the whole batch ----
    rm2 = pairwise_max(z2)
    h1 = bfv1_ref[...]
    for i in range(hp2):
        h1 = h1 + jnp.dot(rm2[2 * i:2 * i + 1, :], g_ref[i],
                          preferred_element_type=f32)
    h1 = jnp.maximum(h1, 0.0)

    # ---- fc2 (block-diagonal over the batch) + bias; single (1, N*OUT) store ----
    o_ref[...] = jnp.dot(h1, wf2b_ref[...], preferred_element_type=f32) + bfv2_ref[...]


# ----------------------------------------------------------------------------
# Wrapper: all layout plumbing + one pallas_call for the whole forward pass.
# ----------------------------------------------------------------------------
@jax.jit
def basenet_forward(x, params):
    w1, b1, w2, b2, wf1, bf1, wf2, bf2 = params
    n, cin, h, w = x.shape
    assert cin == 1, "BaseNet.conv1 has in_channels=1"
    c1, _, k, _ = w1.shape
    c2 = w2.shape[0]
    fc = wf1.shape[1]
    out_classes = wf2.shape[1]

    ho1, wo1 = h - k + 1, w - k + 1          # conv1 output
    hp1, wp1 = ho1 // 2, wo1 // 2            # pool1 output
    ho2, wo2 = hp1 - k + 1, wp1 - k + 1      # conv2 output
    hp2, wp2 = ho2 // 2, wo2 // 2            # pool2 output
    nsz = c2 * hp2 * wp2                     # flattened features per sample

    seg1, seg2, seg3 = w, wp1, wo2           # lane-segment widths per stage
    lc1 = n * c1 * seg1                      # conv1-stage lanes (=128 here)
    lc1s = lc1 - (k - 1)                     # sliced tap width, conv1
    lp1 = lc1s - 1                           # width after pairwise max, pool1
    lc2 = n * c2 * c1 * seg2                 # conv2-stage lanes (co2-replicated)
    lc2s = lc2 - (k - 1)                     # sliced tap width, conv2
    lz = n * c2 * seg3                       # post-conv2 (n, co2) lanes
    lzp = lz - 1                             # width after pairwise max, pool2

    # ---- lane-packed input slab: xs[h, (n*c1+co)*seg1 + j] = x[n, 0, h, j] ----
    xs = jnp.transpose(jnp.broadcast_to(x[:, 0][:, None], (n, c1, h, w)),
                       (2, 0, 1, 3)).reshape(h, lc1)

    # ---- lane-replicated conv weights / biases (VMEM vectors, no SMEM scalars) ----
    wv1 = jnp.broadcast_to(w1[:, 0].reshape(c1, k * k).T[:, None, :, None],
                           (k * k, n, c1, seg1)).reshape(k * k, lc1)[:, :lc1s]
    bv1 = jnp.broadcast_to(b1[None, :, None],
                           (n, c1, seg1)).reshape(1, lc1)[:, :lc1s]
    wv2 = jnp.broadcast_to(
        jnp.transpose(w2.reshape(c2, c1, k * k), (2, 0, 1))[:, None, :, :, None],
        (k * k, n, c2, c1, seg2)).reshape(k * k, lc2)[:, :lc2s]
    bv2 = jnp.broadcast_to(b2[None, :, None], (n, c2, seg3)).reshape(1, lz)

    # ---- 0/1 selection constants (numpy, baked at trace time) ----
    rsel1 = np.zeros((hp1, ho1 - 1), np.float32)       # pool1 even-row select
    rsel1[np.arange(hp1), 2 * np.arange(hp1)] = 1.0

    csel1 = np.zeros((lp1, lc2), np.float32)           # pool1 even-col select +
    for nn in range(n):                                # replication across conv2 co2
        for ci in range(c1):
            for co in range(c2):
                for j in range(wp1):
                    csel1[(nn * c1 + ci) * seg1 + 2 * j,
                          ((nn * c2 + co) * c1 + ci) * seg2 + j] = 1.0

    s2 = np.zeros((lc2s, lz), np.float32)              # conv2 ci-sum + compaction
    for nn in range(n):
        for co in range(c2):
            for ci in range(c1):
                for j in range(wo2):
                    s2[((nn * c2 + co) * c1 + ci) * seg2 + j,
                       (nn * c2 + co) * seg3 + j] = 1.0

    psel = np.zeros((hp2, lzp, n, nsz), np.float32)    # pool2 select + torch .view order
    for i in range(hp2):
        for nn in range(n):
            for co in range(c2):
                for j in range(wp2):
                    psel[i, (nn * c2 + co) * seg3 + 2 * j, nn,
                         (co * hp2 + i) * wp2 + j] = 1.0

    # ---- fc weights with pool2-select / batch structure folded in ----
    g = (jnp.asarray(psel).reshape(hp2 * lzp * n, nsz) @ wf1).reshape(hp2, lzp, n * fc)
    bfv1 = jnp.tile(bf1, n).reshape(1, n * fc)
    wf2b = jnp.kron(jnp.eye(n, dtype=wf2.dtype), wf2)  # block-diagonal over the batch
    bfv2 = jnp.tile(bf2, n).reshape(1, n * out_classes)

    kern = functools.partial(_basenet_kernel, k=k, ho1=ho1, ho2=ho2, hp2=hp2)
    vmem = pl.BlockSpec(memory_space=pltpu.MemorySpace.VMEM)

    # No grid: one invocation processes the whole (tiny) batch; every intermediate
    # stays in VMEM/vregs and only the (1, N*OUT) logits row goes back to HBM.
    # TODO(synk): for real batch sizes, tile the batch with grid=(pl.cdiv(N, tn),)
    # and dimension_semantics=("parallel",) so v7x's two TensorCores are both used.
    out_flat = pl.pallas_call(
        kern,
        out_shape=jax.ShapeDtypeStruct((1, n * out_classes), jnp.float32),
        in_specs=[vmem] * 12,
        out_specs=vmem,
    )(xs, wv1, bv1, jnp.asarray(rsel1), jnp.asarray(csel1), wv2,
      jnp.asarray(s2), bv2, g, bfv1, wf2b, bfv2)
    return out_flat.reshape(n, out_classes)


# ----------------------------------------------------------------------------
# Pure-JAX reference for verification.
# ----------------------------------------------------------------------------
def reference_forward(x, params):
    w1, b1, w2, b2, wf1, bf1, wf2, bf2 = params
    dn = ("NCHW", "OIHW", "NCHW")
    y = jax.lax.conv_general_dilated(x, w1, (1, 1), "VALID", dimension_numbers=dn)
    y = jnp.maximum(y + b1[None, :, None, None], 0.0)
    y = jax.lax.reduce_window(y, -jnp.inf, jax.lax.max, (1, 1, 2, 2), (1, 1, 2, 2), "VALID")
    y = jax.lax.conv_general_dilated(y, w2, (1, 1), "VALID", dimension_numbers=dn)
    y = jnp.maximum(y + b2[None, :, None, None], 0.0)
    y = jax.lax.reduce_window(y, -jnp.inf, jax.lax.max, (1, 1, 2, 2), (1, 1, 2, 2), "VALID")
    y = y.reshape(y.shape[0], -1)
    y = jnp.maximum(y @ wf1 + bf1, 0.0)
    return y @ wf2 + bf2


if __name__ == "__main__":
    K = config["kernel_size"]
    FC = config["fc_layer_size"]
    N, Cin, H, W = 2, 1, 16, 16  # Conv2d(in_channels=1); small spatial size

    # Static replica of _get_conv_output: infer flattened feature size.
    hh, ww = H, W
    hh, ww = (hh - K + 1) // 2, (ww - K + 1) // 2   # conv1 + pool1
    hh, ww = (hh - K + 1) // 2, (ww - K + 1) // 2   # conv2 + pool2
    n_size = 8 * hh * ww

    key = jax.random.PRNGKey(0)
    ks = jax.random.split(key, 9)
    params = (
        jax.random.normal(ks[0], (4, Cin, K, K), jnp.float32) * 0.1,     # conv1.weight
        jax.random.normal(ks[1], (4,), jnp.float32) * 0.1,               # conv1.bias
        jax.random.normal(ks[2], (8, 4, K, K), jnp.float32) * 0.1,       # conv2.weight
        jax.random.normal(ks[3], (8,), jnp.float32) * 0.1,               # conv2.bias
        jax.random.normal(ks[4], (n_size, FC), jnp.float32) * 0.1,       # fc1.weight (in,out)
        jax.random.normal(ks[5], (FC,), jnp.float32) * 0.1,              # fc1.bias
        jax.random.normal(ks[6], (FC, OUT_CLASSES), jnp.float32) * 0.1,  # fc2.weight (in,out)
        jax.random.normal(ks[7], (OUT_CLASSES,), jnp.float32) * 0.1,     # fc2.bias
    )
    x = jax.random.normal(ks[8], (N, Cin, H, W), jnp.float32)

    out = jax.block_until_ready(basenet_forward(x, params))
    ref = jax.block_until_ready(reference_forward(x, params))
    assert out.shape == (N, OUT_CLASSES), out.shape
    np.testing.assert_allclose(np.asarray(out), np.asarray(ref), atol=1e-4, rtol=1e-4)
    print("KERNEL_OK")
</pallas_src>

<mosaic_0001>
module attributes {stable_mosaic.version = 11 : i64} {
  func.func @_basenet_kernel(%arg0: memref<16x128xf32, #tpu.memory_space<vmem>>, %arg1: memref<9x126xf32, #tpu.memory_space<vmem>>, %arg2: memref<1x126xf32, #tpu.memory_space<vmem>>, %arg3: memref<7x13xf32, #tpu.memory_space<vmem>>, %arg4: memref<125x448xf32, #tpu.memory_space<vmem>>, %arg5: memref<9x446xf32, #tpu.memory_space<vmem>>, %arg6: memref<446x80xf32, #tpu.memory_space<vmem>>, %arg7: memref<1x80xf32, #tpu.memory_space<vmem>>, %arg8: memref<2x79x64xf32, #tpu.memory_space<vmem>>, %arg9: memref<1x64xf32, #tpu.memory_space<vmem>>, %arg10: memref<64x20xf32, #tpu.memory_space<vmem>>, %arg11: memref<1x20xf32, #tpu.memory_space<vmem>>, %arg12: memref<1x20xf32, #tpu.memory_space<vmem>>) attributes {dimension_semantics = [], scalar_prefetch = 0 : i64, scratch_operands = 0 : i64, tpu.core_type = #tpu.core_type<tc>} {
    %c0 = arith.constant 0 : index
    %c0_0 = arith.constant 0 : index
    %0 = vector.load %arg0[%c0, %c0_0] : memref<16x128xf32, #tpu.memory_space<vmem>>, vector<16x128xf32>
    %c0_1 = arith.constant 0 : index
    %c0_2 = arith.constant 0 : index
    %1 = vector.load %arg1[%c0_1, %c0_2] : memref<9x126xf32, #tpu.memory_space<vmem>>, vector<9x126xf32>
    %2 = vector.extract_strided_slice %1 {offsets = [0, 0], sizes = [1, 126], strides = [1, 1]} : vector<9x126xf32> to vector<1x126xf32>
    %3 = vector.extract_strided_slice %0 {offsets = [0, 0], sizes = [14, 126], strides = [1, 1]} : vector<16x128xf32> to vector<14x126xf32>
    %4 = vector.broadcast %2 : vector<1x126xf32> to vector<14x126xf32>
    %5 = arith.mulf %4, %3 : vector<14x126xf32>
    %6 = vector.extract_strided_slice %1 {offsets = [1, 0], sizes = [1, 126], strides = [1, 1]} : vector<9x126xf32> to vector<1x126xf32>
    %7 = vector.extract_strided_slice %0 {offsets = [0, 1], sizes = [14, 126], strides = [1, 1]} : vector<16x128xf32> to vector<14x126xf32>
    %8 = vector.broadcast %6 : vector<1x126xf32> to vector<14x126xf32>
    %9 = arith.mulf %8, %7 : vector<14x126xf32>
    %10 = arith.addf %5, %9 : vector<14x126xf32>
    %11 = vector.extract_strided_slice %1 {offsets = [2, 0], sizes = [1, 126], strides = [1, 1]} : vector<9x126xf32> to vector<1x126xf32>
    %12 = vector.extract_strided_slice %0 {offsets = [0, 2], sizes = [14, 126], strides = [1, 1]} : vector<16x128xf32> to vector<14x126xf32>
    %13 = vector.broadcast %11 : vector<1x126xf32> to vector<14x126xf32>
    %14 = arith.mulf %13, %12 : vector<14x126xf32>
    %15 = arith.addf %10, %14 : vector<14x126xf32>
    %16 = vector.extract_strided_slice %1 {offsets = [3, 0], sizes = [1, 126], strides = [1, 1]} : vector<9x126xf32> to vector<1x126xf32>
    %17 = vector.extract_strided_slice %0 {offsets = [1, 0], sizes = [14, 126], strides = [1, 1]} : vector<16x128xf32> to vector<14x126xf32>
    %18 = vector.broadcast %16 : vector<1x126xf32> to vector<14x126xf32>
    %19 = arith.mulf %18, %17 : vector<14x126xf32>
    %20 = arith.addf %15, %19 : vector<14x126xf32>
    %21 = vector.extract_strided_slice %1 {offsets = [4, 0], sizes = [1, 126], strides = [1, 1]} : vector<9x126xf32> to vector<1x126xf32>
    %22 = vector.extract_strided_slice %0 {offsets = [1, 1], sizes = [14, 126], strides = [1, 1]} : vector<16x128xf32> to vector<14x126xf32>
    %23 = vector.broadcast %21 : vector<1x126xf32> to vector<14x126xf32>
    %24 = arith.mulf %23, %22 : vector<14x126xf32>
    %25 = arith.addf %20, %24 : vector<14x126xf32>
    %26 = vector.extract_strided_slice %1 {offsets = [5, 0], sizes = [1, 126], strides = [1, 1]} : vector<9x126xf32> to vector<1x126xf32>
    %27 = vector.extract_strided_slice %0 {offsets = [1, 2], sizes = [14, 126], strides = [1, 1]} : vector<16x128xf32> to vector<14x126xf32>
    %28 = vector.broadcast %26 : vector<1x126xf32> to vector<14x126xf32>
    %29 = arith.mulf %28, %27 : vector<14x126xf32>
    %30 = arith.addf %25, %29 : vector<14x126xf32>
    %31 = vector.extract_strided_slice %1 {offsets = [6, 0], sizes = [1, 126], strides = [1, 1]} : vector<9x126xf32> to vector<1x126xf32>
    %32 = vector.extract_strided_slice %0 {offsets = [2, 0], sizes = [14, 126], strides = [1, 1]} : vector<16x128xf32> to vector<14x126xf32>
    %33 = vector.broadcast %31 : vector<1x126xf32> to vector<14x126xf32>
    %34 = arith.mulf %33, %32 : vector<14x126xf32>
    %35 = arith.addf %30, %34 : vector<14x126xf32>
    %36 = vector.extract_strided_slice %1 {offsets = [7, 0], sizes = [1, 126], strides = [1, 1]} : vector<9x126xf32> to vector<1x126xf32>
    %37 = vector.extract_strided_slice %0 {offsets = [2, 1], sizes = [14, 126], strides = [1, 1]} : vector<16x128xf32> to vector<14x126xf32>
    %38 = vector.broadcast %36 : vector<1x126xf32> to vector<14x126xf32>
    %39 = arith.mulf %38, %37 : vector<14x126xf32>
    %40 = arith.addf %35, %39 : vector<14x126xf32>
    %41 = vector.extract_strided_slice %1 {offsets = [8, 0], sizes = [1, 126], strides = [1, 1]} : vector<9x126xf32> to vector<1x126xf32>
    %42 = vector.extract_strided_slice %0 {offsets = [2, 2], sizes = [14, 126], strides = [1, 1]} : vector<16x128xf32> to vector<14x126xf32>
    %43 = vector.broadcast %41 : vector<1x126xf32> to vector<14x126xf32>
    %44 = arith.mulf %43, %42 : vector<14x126xf32>
    %45 = arith.addf %40, %44 : vector<14x126xf32>
    %c0_3 = arith.constant 0 : index
    %c0_4 = arith.constant 0 : index
    %46 = vector.load %arg2[%c0_3, %c0_4] : memref<1x126xf32, #tpu.memory_space<vmem>>, vector<1x126xf32>
    %47 = vector.broadcast %46 : vector<1x126xf32> to vector<14x126xf32>
    %48 = arith.addf %45, %47 : vector<14x126xf32>
    %cst = arith.constant 0.000000e+00 : f32
    %49 = vector.broadcast %cst : f32 to vector<14x126xf32>
    %50 = arith.maximumf %48, %49 : vector<14x126xf32>
    %51 = vector.extract_strided_slice %50 {offsets = [0, 0], sizes = [14, 125], strides = [1, 1]} : vector<14x126xf32> to vector<14x125xf32>
    %52 = vector.extract_strided_slice %50 {offsets = [0, 1], sizes = [14, 125], strides = [1, 1]} : vector<14x126xf32> to vector<14x125xf32>
    %53 = arith.maximumf %51, %52 : vector<14x125xf32>
    %54 = vector.extract_strided_slice %53 {offsets = [0, 0], sizes = [13, 125], strides = [1, 1]} : vector<14x125xf32> to vector<13x125xf32>
    %55 = vector.extract_strided_slice %53 {offsets = [1, 0], sizes = [13, 125], strides = [1, 1]} : vector<14x125xf32> to vector<13x125xf32>
    %56 = arith.maximumf %54, %55 : vector<13x125xf32>
    %c0_5 = arith.constant 0 : index
    %c0_6 = arith.constant 0 : index
    %57 = vector.load %arg3[%c0_5, %c0_6] : memref<7x13xf32, #tpu.memory_space<vmem>>, vector<7x13xf32>
    %cst_7 = arith.constant dense<0.000000e+00> : vector<7x125xf32>
    %58 = tpu.matmul %57, %56, %cst_7 {dimension_numbers = #tpu.dot_dimension_numbers<[1], [0], [0], [1], [0, 0, 1, 1], [], []>} : vector<7x13xf32>, vector<13x125xf32>, vector<7x125xf32> -> vector<7x125xf32>
    %c0_8 = arith.constant 0 : index
    %c0_9 = arith.constant 0 : index
    %59 = vector.load %arg4[%c0_8, %c0_9] : memref<125x448xf32, #tpu.memory_space<vmem>>, vector<125x448xf32>
    %cst_10 = arith.constant dense<0.000000e+00> : vector<7x448xf32>
    %60 = tpu.matmul %58, %59, %cst_10 {dimension_numbers = #tpu.dot_dimension_numbers<[1], [0], [0], [1], [0, 0, 1, 1], [], []>} : vector<7x125xf32>, vector<125x448xf32>, vector<7x448xf32> -> vector<7x448xf32>
    %c0_11 = arith.constant 0 : index
    %c0_12 = arith.constant 0 : index
    %61 = vector.load %arg5[%c0_11, %c0_12] : memref<9x446xf32, #tpu.memory_space<vmem>>, vector<9x446xf32>
    %62 = vector.extract_strided_slice %61 {offsets = [0, 0], sizes = [1, 446], strides = [1, 1]} : vector<9x446xf32> to vector<1x446xf32>
    %63 = vector.extract_strided_slice %60 {offsets = [0, 0], sizes = [5, 446], strides = [1, 1]} : vector<7x448xf32> to vector<5x446xf32>
    %64 = vector.broadcast %62 : vector<1x446xf32> to vector<5x446xf32>
    %65 = arith.mulf %64, %63 : vector<5x446xf32>
    %66 = vector.extract_strided_slice %61 {offsets = [1, 0], sizes = [1, 446], strides = [1, 1]} : vector<9x446xf32> to vector<1x446xf32>
    %67 = vector.extract_strided_slice %60 {offsets = [0, 1], sizes = [5, 446], strides = [1, 1]} : vector<7x448xf32> to vector<5x446xf32>
    %68 = vector.broadcast %66 : vector<1x446xf32> to vector<5x446xf32>
    %69 = arith.mulf %68, %67 : vector<5x446xf32>
    %70 = arith.addf %65, %69 : vector<5x446xf32>
    %71 = vector.extract_strided_slice %61 {offsets = [2, 0], sizes = [1, 446], strides = [1, 1]} : vector<9x446xf32> to vector<1x446xf32>
    %72 = vector.extract_strided_slice %60 {offsets = [0, 2], sizes = [5, 446], strides = [1, 1]} : vector<7x448xf32> to vector<5x446xf32>
    %73 = vector.broadcast %71 : vector<1x446xf32> to vector<5x446xf32>
    %74 = arith.mulf %73, %72 : vector<5x446xf32>
    %75 = arith.addf %70, %74 : vector<5x446xf32>
    %76 = vector.extract_strided_slice %61 {offsets = [3, 0], sizes = [1, 446], strides = [1, 1]} : vector<9x446xf32> to vector<1x446xf32>
    %77 = vector.extract_strided_slice %60 {offsets = [1, 0], sizes = [5, 446], strides = [1, 1]} : vector<7x448xf32> to vector<5x446xf32>
    %78 = vector.broadcast %76 : vector<1x446xf32> to vector<5x446xf32>
    %79 = arith.mulf %78, %77 : vector<5x446xf32>
    %80 = arith.addf %75, %79 : vector<5x446xf32>
    %81 = vector.extract_strided_slice %61 {offsets = [4, 0], sizes = [1, 446], strides = [1, 1]} : vector<9x446xf32> to vector<1x446xf32>
    %82 = vector.extract_strided_slice %60 {offsets = [1, 1], sizes = [5, 446], strides = [1, 1]} : vector<7x448xf32> to vector<5x446xf32>
    %83 = vector.broadcast %81 : vector<1x446xf32> to vector<5x446xf32>
    %84 = arith.mulf %83, %82 : vector<5x446xf32>
    %85 = arith.addf %80, %84 : vector<5x446xf32>
    %86 = vector.extract_strided_slice %61 {offsets = [5, 0], sizes = [1, 446], strides = [1, 1]} : vector<9x446xf32> to vector<1x446xf32>
    %87 = vector.extract_strided_slice %60 {offsets = [1, 2], sizes = [5, 446], strides = [1, 1]} : vector<7x448xf32> to vector<5x446xf32>
    %88 = vector.broadcast %86 : vector<1x446xf32> to vector<5x446xf32>
    %89 = arith.mulf %88, %87 : vector<5x446xf32>
    %90 = arith.addf %85, %89 : vector<5x446xf32>
    %91 = vector.extract_strided_slice %61 {offsets = [6, 0], sizes = [1, 446], strides = [1, 1]} : vector<9x446xf32> to vector<1x446xf32>
    %92 = vector.extract_strided_slice %60 {offsets = [2, 0], sizes = [5, 446], strides = [1, 1]} : vector<7x448xf32> to vector<5x446xf32>
    %93 = vector.broadcast %91 : vector<1x446xf32> to vector<5x446xf32>
    %94 = arith.mulf %93, %92 : vector<5x446xf32>
    %95 = arith.addf %90, %94 : vector<5x446xf32>
    %96 = vector.extract_strided_slice %61 {offsets = [7, 0], sizes = [1, 446], strides = [1, 1]} : vector<9x446xf32> to vector<1x446xf32>
    %97 = vector.extract_strided_slice %60 {offsets = [2, 1], sizes = [5, 446], strides = [1, 1]} : vector<7x448xf32> to vector<5x446xf32>
    %98 = vector.broadcast %96 : vector<1x446xf32> to vector<5x446xf32>
    %99 = arith.mulf %98, %97 : vector<5x446xf32>
    %100 = arith.addf %95, %99 : vector<5x446xf32>
    %101 = vector.extract_strided_slice %61 {offsets = [8, 0], sizes = [1, 446], strides = [1, 1]} : vector<9x446xf32> to vector<1x446xf32>
    %102 = vector.extract_strided_slice %60 {offsets = [2, 2], sizes = [5, 446], strides = [1, 1]} : vector<7x448xf32> to vector<5x446xf32>
    %103 = vector.broadcast %101 : vector<1x446xf32> to vector<5x446xf32>
    %104 = arith.mulf %103, %102 : vector<5x446xf32>
    %105 = arith.addf %100, %104 : vector<5x446xf32>
    %c0_13 = arith.constant 0 : index
    %c0_14 = arith.constant 0 : index
    %106 = vector.load %arg6[%c0_13, %c0_14] : memref<446x80xf32, #tpu.memory_space<vmem>>, vector<446x80xf32>
    %cst_15 = arith.constant dense<0.000000e+00> : vector<5x80xf32>
    %107 = tpu.matmul %105, %106, %cst_15 {dimension_numbers = #tpu.dot_dimension_numbers<[1], [0], [0], [1], [0, 0, 1, 1], [], []>} : vector<5x446xf32>, vector<446x80xf32>, vector<5x80xf32> -> vector<5x80xf32>
    %c0_16 = arith.constant 0 : index
    %c0_17 = arith.constant 0 : index
    %108 = vector.load %arg7[%c0_16, %c0_17] : memref<1x80xf32, #tpu.memory_space<vmem>>, vector<1x80xf32>
    %109 = vector.broadcast %108 : vector<1x80xf32> to vector<5x80xf32>
    %110 = arith.addf %107, %109 : vector<5x80xf32>
    %cst_18 = arith.constant 0.000000e+00 : f32
    %111 = vector.broadcast %cst_18 : f32 to vector<5x80xf32>
    %112 = arith.maximumf %110, %111 : vector<5x80xf32>
    %113 = vector.extract_strided_slice %112 {offsets = [0, 0], sizes = [5, 79], strides = [1, 1]} : vector<5x80xf32> to vector<5x79xf32>
    %114 = vector.extract_strided_slice %112 {offsets = [0, 1], sizes = [5, 79], strides = [1, 1]} : vector<5x80xf32> to vector<5x79xf32>
    %115 = arith.maximumf %113, %114 : vector<5x79xf32>
    %116 = vector.extract_strided_slice %115 {offsets = [0, 0], sizes = [4, 79], strides = [1, 1]} : vector<5x79xf32> to vector<4x79xf32>
    %117 = vector.extract_strided_slice %115 {offsets = [1, 0], sizes = [4, 79], strides = [1, 1]} : vector<5x79xf32> to vector<4x79xf32>
    %118 = arith.maximumf %116, %117 : vector<4x79xf32>
    %c0_19 = arith.constant 0 : index
    %c0_20 = arith.constant 0 : index
    %119 = vector.load %arg9[%c0_19, %c0_20] : memref<1x64xf32, #tpu.memory_space<vmem>>, vector<1x64xf32>
    %120 = vector.extract_strided_slice %118 {offsets = [0, 0], sizes = [1, 79], strides = [1, 1]} : vector<4x79xf32> to vector<1x79xf32>
    %c0_21 = arith.constant 0 : index
    %c0_22 = arith.constant 0 : index
    %c0_23 = arith.constant 0 : index
    %121 = vector.load %arg8[%c0_21, %c0_22, %c0_23] : memref<2x79x64xf32, #tpu.memory_space<vmem>>, vector<1x79x64xf32>
    %122 = vector.shape_cast %121 : vector<1x79x64xf32> to vector<79x64xf32>
    %cst_24 = arith.constant dense<0.000000e+00> : vector<1x64xf32>
    %123 = tpu.matmul %120, %122, %cst_24 {dimension_numbers = #tpu.dot_dimension_numbers<[1], [0], [0], [1], [0, 0, 1, 1], [], []>} : vector<1x79xf32>, vector<79x64xf32>, vector<1x64xf32> -> vector<1x64xf32>
    %124 = arith.addf %119, %123 : vector<1x64xf32>
    %125 = vector.extract_strided_slice %118 {offsets = [2, 0], sizes = [1, 79], strides = [1, 1]} : vector<4x79xf32> to vector<1x79xf32>
    %c1 = arith.constant 1 : index
    %c0_25 = arith.constant 0 : index
    %c0_26 = arith.constant 0 : index
    %126 = vector.load %arg8[%c1, %c0_25, %c0_26] : memref<2x79x64xf32, #tpu.memory_space<vmem>>, vector<1x79x64xf32>
    %127 = vector.shape_cast %126 : vector<1x79x64xf32> to vector<79x64xf32>
    %cst_27 = arith.constant dense<0.000000e+00> : vector<1x64xf32>
    %128 = tpu.matmul %125, %127, %cst_27 {dimension_numbers = #tpu.dot_dimension_numbers<[1], [0], [0], [1], [0, 0, 1, 1], [], []>} : vector<1x79xf32>, vector<79x64xf32>, vector<1x64xf32> -> vector<1x64xf32>
    %129 = arith.addf %124, %128 : vector<1x64xf32>
    %cst_28 = arith.constant 0.000000e+00 : f32
    %130 = vector.broadcast %cst_28 : f32 to vector<1x64xf32>
    %131 = arith.maximumf %129, %130 : vector<1x64xf32>
    %c0_29 = arith.constant 0 : index
    %c0_30 = arith.constant 0 : index
    %132 = vector.load %arg10[%c0_29, %c0_30] : memref<64x20xf32, #tpu.memory_space<vmem>>, vector<64x20xf32>
    %cst_31 = arith.constant dense<0.000000e+00> : vector<1x20xf32>
    %133 = tpu.matmul %131, %132, %cst_31 {dimension_numbers = #tpu.dot_dimension_numbers<[1], [0], [0], [1], [0, 0, 1, 1], [], []>} : vector<1x64xf32>, vector<64x20xf32>, vector<1x20xf32> -> vector<1x20xf32>
    %c0_32 = arith.constant 0 : index
    %c0_33 = arith.constant 0 : index
    %134 = vector.load %arg11[%c0_32, %c0_33] : memref<1x20xf32, #tpu.memory_space<vmem>>, vector<1x20xf32>
    %135 = arith.addf %133, %134 : vector<1x20xf32>
    %c0_34 = arith.constant 0 : index
    %c0_35 = arith.constant 0 : index
    %136 = vector.load %arg12[%c0_34, %c0_35] : memref<1x20xf32, #tpu.memory_space<vmem>>, vector<1x20xf32>
    tpu.vector_store %arg12[%c0_34, %c0_35], %135 {strides = array<i32>} : memref<1x20xf32, #tpu.memory_space<vmem>>, vector<1x20xf32>,
    return
  }
}

</mosaic_0001>

<llo_original>
// kernel: tile.13
$region0: #{tile.13}
  #allocation0 [shape = 's32[1]{0}', space=sflag, size = 0x4, scoped, tag = 'scoped memory for tile.13']
  %s0 = inlined_call_operand.vmem [shape: f32[32], index: 0, kind: input, shape index: {}]
  %s1 = inlined_call_operand.vmem [shape: f32[2,32], index: 1, kind: output, shape index: {}]
  // Predicated region
  $region2: #{tile.13} parent=0 // pred_check
    _
  $region3: #{tile.13} parent=0 // pred_check_branch
    %3 = sbr.rel (0) target = $region5
  $region4: #{tile.13} parent=0 // pred_region
    _
  $region5: #{tile.13} parent=0 // pred_fallthru
    _
  %v4 = vld [vmem:[%s0] ss:$0 sm:$0xff]
  %5 = vst [vmem:[%s1] sm:$0x3] %v4

// kernel: tile.14
$region0: #{tile.14}
  %s0 = inlined_call_operand.vmem [shape: f32[2,32], index: 0, kind: input, shape index: {}]
  %s1 = inlined_call_operand.vmem [shape: f32[1,64], index: 1, kind: output, shape index: {}]
  $region1: #{tile.14} parent=0
    #allocation0 [shape = 'u8[4096]{0}', space=vmem, size = 0x1000, scoped, tag = 'scoped mem for output reshape']
    #allocation1 [shape = 'u8[4096]{0}', space=vmem, size = 0x1000, scoped, tag = 'scoped mem for input reshape']
    %s3 = sshllo.u32 0, 2
    %v4 = vld [vmem:[%s0] sm:%s3]
    %5 = vst [vmem:[#allocation1] sm:%s3] %v4
    %v6 = vld [vmem:[#allocation1] sm:$0x1]
    %vm7 = vcmask 261120
    %8 = vst.msk [vmem:[#allocation0] sm:$0x1] %vm7, %v6
    %s9 = scalar_lea.vmem [#allocation1], 1
    %v10 = vld [vmem:[%s9] sm:$0x1]
    %11 = vrot.lane.b32.xlu0 %v10, 32
    %v12 = vpop.permute.xlu0 %11
    %vm13 = vcmask 523520
    %14 = vst.msk [vmem:[#allocation0] sm:$0x1] %vm13, %v12
    %s16 = sshllo.u32 0, 1
    %v18 = vld [vmem:[#allocation0] sm:%s16]
    %s19 = sshllo.u32 0, 1
    %20 = vst [vmem:[%s1] sm:%s19] %v18

// kernel: tile.18
$region0: #{tile.18}
  #allocation0 [shape = 's32[1]{0}', space=sflag, size = 0x4, scoped, tag = 'scoped memory for tile.18']
  %s0 = inlined_call_operand.vmem [shape: f32[10], index: 0, kind: input, shape index: {}]
  %s1 = inlined_call_operand.vmem [shape: f32[2,10], index: 1, kind: output, shape index: {}]
  // Predicated region
  $region2: #{tile.18} parent=0 // pred_check
    _
  $region3: #{tile.18} parent=0 // pred_check_branch
    %3 = sbr.rel (0) target = $region5
  $region4: #{tile.18} parent=0 // pred_region
    _
  $region5: #{tile.18} parent=0 // pred_fallthru
    _
  %v4 = vld [vmem:[%s0] ss:$0 sm:$0xff]
  %5 = vst [vmem:[%s1] sm:$0x3] %v4

// kernel: tile.19
$region0: #{tile.19}
  %s0 = inlined_call_operand.vmem [shape: f32[2,10], index: 0, kind: input, shape index: {}]
  %s1 = inlined_call_operand.vmem [shape: f32[1,20], index: 1, kind: output, shape index: {}]
  $region1: #{tile.19} parent=0
    #allocation0 [shape = 'u8[4096]{0}', space=vmem, size = 0x1000, scoped, tag = 'scoped mem for output reshape']
    #allocation1 [shape = 'u8[4096]{0}', space=vmem, size = 0x1000, scoped, tag = 'scoped mem for input reshape']
    %s3 = sshllo.u32 0, 2
    %v4 = vld [vmem:[%s0] sm:%s3]
    %5 = vst [vmem:[#allocation1] sm:%s3] %v4
    %v6 = vld [vmem:[#allocation1] sm:$0x1]
    %vm7 = vcmask 80896
    %8 = vst.msk [vmem:[#allocation0] sm:$0x1] %vm7, %v6
    %s9 = scalar_lea.vmem [#allocation1], 1
    %v10 = vld [vmem:[%s9] sm:$0x1]
    %11 = vrot.lane.b32.xlu0 %v10, 10
    %v12 = vpop.permute.xlu0 %11
    %vm13 = vcmask 162896
    %14 = vst.msk [vmem:[#allocation0] sm:$0x1] %vm13, %v12
    %s16 = sshllo.u32 0, 1
    %v18 = vld [vmem:[#allocation0] sm:%s16]
    %s19 = sshllo.u32 0, 1
    %20 = vst [vmem:[%s1] sm:%s19] %v18

// kernel: basenet_forward.1
$region0: #{basenet_forward.1}
  #allocation0 [shape = 'u32[]', space=smem, size = 0x4, offset = 0x4, fixed_abs, tag = 'smem constant byte address 0x4 - core index']
  #allocation1 [shape = 'u32[144,128]{1,0:T(1,128)}', space=vmem, size = 0x12000, scoped, tag = 'internal scratch']
  %s0 = inlined_call_operand.vmem [shape: f32[16,128], index: 0, kind: input, shape index: {}]
  %s1 = inlined_call_operand.vmem [shape: f32[9,126], index: 1, kind: input, shape index: {}]
  %s2 = inlined_call_operand.vmem [shape: f32[1,126], index: 2, kind: input, shape index: {}]
  %s3 = inlined_call_operand.vmem [shape: f32[7,13], index: 3, kind: input, shape index: {}]
  %s4 = inlined_call_operand.vmem [shape: f32[125,448], index: 4, kind: input, shape index: {}]
  %s5 = inlined_call_operand.vmem [shape: f32[9,446], index: 5, kind: input, shape index: {}]
  %s6 = inlined_call_operand.vmem [shape: f32[446,80], index: 6, kind: input, shape index: {}]
  %s7 = inlined_call_operand.vmem [shape: f32[1,80], index: 7, kind: input, shape index: {}]
  %s8 = inlined_call_operand.vmem [shape: f32[2,79,64], index: 8, kind: input, shape index: {}]
  %s9 = inlined_call_operand.vmem [shape: f32[1,64], index: 9, kind: input, shape index: {}]
  %s10 = inlined_call_operand.vmem [shape: f32[64,20], index: 10, kind: input, shape index: {}]
  %s11 = inlined_call_operand.vmem [shape: f32[1,20], index: 11, kind: input, shape index: {}]
  %s12 = inlined_call_operand.vmem [shape: f32[1,20], index: 12, kind: output, shape index: {}]
  %s13 = sld [smem:[#allocation0]]
  $region58: #{basenet_forward.1} parent=0
    _
  %s15 = ssub.s32 1, %s13
  %s16 = scalar_select 0, %s15, %s13
  // Predicated region
  $region2: #{basenet_forward.1} parent=0 // pred_check
    _
  $region3: #{basenet_forward.1} parent=0 // pred_check_branch
    %18 = sbr.rel (0) target = $region5
  $region4: #{basenet_forward.1} parent=0 // pred_region
    _
  $region5: #{basenet_forward.1} parent=0 // pred_fallthru
    _
  // Predicated region
  $region6: #{basenet_forward.1} parent=0 // pred_check
    _
  $region7: #{basenet_forward.1} parent=0 // pred_check_branch
    %20 = sbr.rel (0) target = $region9
  $region8: #{basenet_forward.1} parent=0 // pred_region
    _
  $region9: #{basenet_forward.1} parent=0 // pred_fallthru
    _
  // Predicated region
  $region10: #{basenet_forward.1} parent=0 // pred_check
    _
  $region11: #{basenet_forward.1} parent=0 // pred_check_branch
    %22 = sbr.rel (0) target = $region13
  $region12: #{basenet_forward.1} parent=0 // pred_region
    _
  $region13: #{basenet_forward.1} parent=0 // pred_fallthru
    _
  // Predicated region
  $region14: #{basenet_forward.1} parent=0 // pred_check
    _
  $region15: #{basenet_forward.1} parent=0 // pred_check_branch
    %24 = sbr.rel (0) target = $region17
  $region16: #{basenet_forward.1} parent=0 // pred_region
    _
  $region17: #{basenet_forward.1} parent=0 // pred_fallthru
    _
  // Predicated region
  $region18: #{basenet_forward.1} parent=0 // pred_check
    _
  $region19: #{basenet_forward.1} parent=0 // pred_check_branch
    %26 = sbr.rel (0) target = $region21
  $region20: #{basenet_forward.1} parent=0 // pred_region
    _
  $region21: #{basenet_forward.1} parent=0 // pred_fallthru
    _
  // Predicated region
  $region22: #{basenet_forward.1} parent=0 // pred_check
    _
  $region23: #{basenet_forward.1} parent=0 // pred_check_branch
    %28 = sbr.rel (0) target = $region25
  $region24: #{basenet_forward.1} parent=0 // pred_region
    _
  $region25: #{basenet_forward.1} parent=0 // pred_fallthru
    _
  // Predicated region
  $region26: #{basenet_forward.1} parent=0 // pred_check
    _
  $region27: #{basenet_forward.1} parent=0 // pred_check_branch
    %30 = sbr.rel (0) target = $region29
  $region28: #{basenet_forward.1} parent=0 // pred_region
    _
  $region29: #{basenet_forward.1} parent=0 // pred_fallthru
    _
  // Predicated region
  $region30: #{basenet_forward.1} parent=0 // pred_check
    _
  $region31: #{basenet_forward.1} parent=0 // pred_check_branch
    %32 = sbr.rel (0) target = $region33
  $region32: #{basenet_forward.1} parent=0 // pred_region
    _
  $region33: #{basenet_forward.1} parent=0 // pred_fallthru
    _
  // Predicated region
  $region34: #{basenet_forward.1} parent=0 // pred_check
    _
  $region35: #{basenet_forward.1} parent=0 // pred_check_branch
    %34 = sbr.rel (0) target = $region37
  $region36: #{basenet_forward.1} parent=0 // pred_region
    _
  $region37: #{basenet_forward.1} parent=0 // pred_fallthru
    _
  // Predicated region
  $region38: #{basenet_forward.1} parent=0 // pred_check
    _
  $region39: #{basenet_forward.1} parent=0 // pred_check_branch
    %36 = sbr.rel (0) target = $region41
  $region40: #{basenet_forward.1} parent=0 // pred_region
    _
  $region41: #{basenet_forward.1} parent=0 // pred_fallthru
    _
  // Predicated region
  $region42: #{basenet_forward.1} parent=0 // pred_check
    _
  $region43: #{basenet_forward.1} parent=0 // pred_check_branch
    %38 = sbr.rel (0) target = $region45
  $region44: #{basenet_forward.1} parent=0 // pred_region
    _
  $region45: #{basenet_forward.1} parent=0 // pred_fallthru
    _
  // Predicated region
  $region46: #{basenet_forward.1} parent=0 // pred_check
    _
  $region47: #{basenet_forward.1} parent=0 // pred_check_branch
    %40 = sbr.rel (0) target = $region49
  $region48: #{basenet_forward.1} parent=0 // pred_region
    _
  $region49: #{basenet_forward.1} parent=0 // pred_fallthru
    _
  %v41 = vld [vmem:[%s0] sm:$0xff]
  %v42 = vld [vmem:[%s0 + $0x8] sm:$0xff]
  %v43 = vld [vmem:[%s1] sm:$0xff]
  %v44 = vld [vmem:[%s1 + $0x8] sm:$0x1]
  %v45 = vlaneseq
  %v46 = vshrl.u32 %v45, 7
  %v47 = vsub.s32 0, %v46
  %v48 = vrot.slane %v43, %v47
  %v49 = vmul.f32 %v48, %v41
  %v50 = vmul.f32 %v48, %v42
  %v51 = vlaneseq
  %v52 = vshrl.u32 %v51, 7
  %v53 = vsub.s32 1, %v52
  %v54 = vrot.slane %v43, %v53
  %57 = vrot.lane.b32.xlu0 %v41, 127
  %v58 = vpop.permute.xlu0 %57
  %59 = vrot.lane.b32.xlu0 %v42, 127
  %v60 = vpop.permute.xlu0 %59
  %v63 = vmul.f32 %v54, %v58
  %v64 = vmul.f32 %v54, %v60
  %v65 = vadd.f32 %v49, %v63
  %v66 = vadd.f32 %v50, %v64
  %v67 = vlaneseq
  %v68 = vshrl.u32 %v67, 7
  %v69 = vsub.s32 2, %v68
  %v70 = vrot.slane %v43, %v69
  %71 = vrot.lane.b32.xlu0 %v41, 126
  %v72 = vpop.permute.xlu0 %71
  %73 = vrot.lane.b32.xlu0 %v42, 126
  %v74 = vpop.permute.xlu0 %73
  %v77 = vmul.f32 %v70, %v72
  %v78 = vmul.f32 %v70, %v74
  %v79 = vadd.f32 %v65, %v77
  %v80 = vadd.f32 %v66, %v78
  %v81 = vlaneseq
  %v82 = vshrl.u32 %v81, 7
  %v83 = vsub.s32 3, %v82
  %v84 = vrot.slane %v43, %v83
  %v85 = vmul.f32 %v84, %v41
  %v86 = vmul.f32 %v84, %v42
  %vm89 = vcmask 1046528
  %v90 = vrot.slane %v85, 1
  %v91 = vrot.slane %v86, 1
  %v92 = vsel %vm89, %v90, %v91
  %v95 = vadd.f32 %v79, %v92
  %v96 = vadd.f32 %v80, %v91
  %v97 = vlaneseq
  %v98 = vshrl.u32 %v97, 7
  %v99 = vsub.s32 4, %v98
  %v100 = vrot.slane %v43, %v99
  %v101 = vrot.slane %v41, 1
  %v102 = vrot.slane %v42, 1
  %v103 = vsel %vm89, %v101, %v102
  %104 = vrot.lane.b32.xlu0 %v103, 127
  %v105 = vpop.permute.xlu0 %104
  %106 = vrot.lane.b32.xlu0 %v102, 127
  %v107 = vpop.permute.xlu0 %106
  %v110 = vmul.f32 %v100, %v105
  %v111 = vmul.f32 %v100, %v107
  %v112 = vadd.f32 %v95, %v110
  %v113 = vadd.f32 %v96, %v111
  %v114 = vlaneseq
  %v115 = vshrl.u32 %v114, 7
  %v116 = vsub.s32 5, %v115
  %v117 = vrot.slane %v43, %v116
  %118 = vrot.lane.b32.xlu0 %v103, 126
  %v119 = vpop.permute.xlu0 %118
  %120 = vrot.lane.b32.xlu0 %v102, 126
  %v121 = vpop.permute.xlu0 %120
  %v124 = vmul.f32 %v117, %v119
  %v125 = vmul.f32 %v117, %v121
  %v126 = vadd.f32 %v112, %v124
  %v127 = vadd.f32 %v113, %v125
  %v128 = vlaneseq
  %v129 = vshrl.u32 %v128, 7
  %v130 = vsub.s32 6, %v129
  %v131 = vrot.slane %v43, %v130
  %v132 = vmul.f32 %v131, %v41
  %v133 = vmul.f32 %v131, %v42
  %vm136 = vcmask 1045504
  %v137 = vrot.slane %v132, 2
  %v138 = vrot.slane %v133, 2
  %v139 = vsel %vm136, %v137, %v138
  %v142 = vadd.f32 %v126, %v139
  %v143 = vadd.f32 %v127, %v138
  %v144 = vlaneseq
  %v145 = vshrl.u32 %v144, 7
  %v146 = vsub.s32 7, %v145
  %v147 = vrot.slane %v43, %v146
  %v148 = vrot.slane %v41, 2
  %v149 = vrot.slane %v42, 2
  %v150 = vsel %vm136, %v148, %v149
  %151 = vrot.lane.b32.xlu0 %v150, 127
  %v152 = vpop.permute.xlu0 %151
  %153 = vrot.lane.b32.xlu0 %v149, 127
  %v154 = vpop.permute.xlu0 %153
  %v157 = vmul.f32 %v147, %v152
  %v158 = vmul.f32 %v147, %v154
  %v159 = vadd.f32 %v142, %v157
  %v160 = vadd.f32 %v143, %v158
  %v161 = vlaneseq
  %v162 = vshrl.u32 %v161, 7
  %v163 = vsub.s32 0, %v162
  %v164 = vrot.slane %v44, %v163
  %165 = vrot.lane.b32.xlu0 %v150, 126
  %v166 = vpop.permute.xlu0 %165
  %167 = vrot.lane.b32.xlu0 %v149, 126
  %v168 = vpop.permute.xlu0 %167
  %v171 = vmul.f32 %v164, %v166
  %v172 = vmul.f32 %v164, %v168
  %v173 = vadd.f32 %v159, %v171
  %v174 = vadd.f32 %v160, %v172
  %v175 = vld [vmem:[%s2] sm:$0x1]
  %v177 = vlaneseq
  %v178 = vshrl.u32 %v177, 7
  %v179 = vsub.s32 0, %v178
  %v180 = vrot.slane %v175, %v179
  %v182 = vadd.f32 %v173, %v180
  %v183 = vadd.f32 %v174, %v180
  %v184 = vmax.f32 %v182, 0.0
  %v185 = vmax.f32 %v183, 0.0
  %188 = vrot.lane.b32.xlu0 %v184, 127
  %v189 = vpop.permute.xlu0 %188
  %190 = vrot.lane.b32.xlu0 %v185, 127
  %v191 = vpop.permute.xlu0 %190
  %v194 = vmax.f32 %v184, %v189
  %v195 = vmax.f32 %v185, %v191
  %v198 = vrot.slane %v194, 1
  %v199 = vrot.slane %v195, 1
  %v200 = vsel %vm89, %v198, %v199
  %v203 = vmax.f32 %v194, %v200
  %v204 = vmax.f32 %v195, %v199
  %v205 = vld [vmem:[%s3] sm:$0x7f]
  %vm206 = vcmask 105472
  %v208 = vsel %vm206, %v205, 0
  %vm210 = vcmask 1044480
  %v212 = vsel %vm210, %v204, 0
  %214 = vmatprep.subr.mxu0 0.0
  %215 = vmatpush1.msra.mxu0 %v203
  %216 = vmatprep.subr.mxu0 0.0
  %217 = vmatpush1.msra.mxu0 %v212
  %218 = vmatprep.subr.mxu0 0.0
  %219 = vmatpush1.msra.mxu0 0.0
  %220 = vmatprep.subr.mxu0 0.0
  %221 = vmatpush1.msra.mxu0 0.0
  %222 = vmatprep.subr.mxu0 0.0
  %223 = vmatpush1.msra.mxu0 0.0
  %224 = vmatprep.subr.mxu0 0.0
  %225 = vmatpush1.msra.mxu0 0.0
  %226 = vmatprep.subr.mxu0 0.0
  %227 = vmatpush1.msra.mxu0 0.0
  %228 = vmatprep.subr.mxu0 0.0
  %229 = vmatpush1.msra.mxu0 0.0
  %230 = vmatprep.subr.mxu0 0.0
  %231 = vmatpush1.msra.mxu0 0.0
  %232 = vmatprep.subr.mxu0 0.0
  %233 = vmatpush1.msra.mxu0 0.0
  %234 = vmatprep.subr.mxu0 0.0
  %235 = vmatpush1.msra.mxu0 0.0
  %236 = vmatprep.subr.mxu0 0.0
  %237 = vmatpush1.msra.mxu0 0.0
  %238 = vmatprep.subr.mxu0 0.0
  %239 = vmatpush1.msra.mxu0 0.0
  %240 = vmatprep.subr.mxu0 0.0
  %241 = vmatpush1.msra.mxu0 0.0
  %242 = vmatprep.subr.mxu0 0.0
  %243 = vmatpush1.msra.mxu0 0.0
  %244 = vmatprep.subr.mxu0 0.0
  %245 = vmatpush1.msra.mxu0 0.0
  %246 = vmatprep.subr.mxu0 0.0
  %247 = vmatpush1.msra.mxu0 0.0
  %248 = vmatprep.subr.mxu0 0.0
  %249 = vmatpush1.msra.mxu0 0.0
  %250 = vmatprep.subr.mxu0 0.0
  %251 = vmatpush1.msra.mxu0 0.0
  %252 = vmatprep.subr.mxu0 0.0
  %253 = vmatpush1.msra.mxu0 0.0
  %254 = vmatprep.subr.mxu0 0.0
  %255 = vmatpush1.msra.mxu0 0.0
  %256 = vmatprep.subr.mxu0 0.0
  %257 = vmatpush1.msra.mxu0 0.0
  %258 = vmatprep.subr.mxu0 0.0
  %259 = vmatpush1.msra.mxu0 0.0
  %260 = vmatprep.subr.mxu0 0.0
  %261 = vmatpush1.msra.mxu0 0.0
  %262 = vmatprep.subr.mxu0 0.0
  %263 = vmatpush1.msra.mxu0 0.0
  %264 = vmatprep.subr.mxu0 0.0
  %265 = vmatpush1.msra.mxu0 0.0
  %266 = vmatprep.subr.mxu0 0.0
  %267 = vmatpush1.msra.mxu0 0.0
  %268 = vmatprep.subr.mxu0 0.0
  %269 = vmatpush1.msra.mxu0 0.0
  %270 = vmatprep.subr.mxu0 0.0
  %271 = vmatpush1.msra.mxu0 0.0
  %272 = vmatprep.subr.mxu0 0.0
  %273 = vmatpush1.msra.mxu0 0.0
  %274 = vmatprep.subr.mxu0 0.0
  %275 = vmatpush1.msra.mxu0 0.0
  %276 = vmatprep.subr.mxu0 0.0
  %277 = vmatpush1.msra.mxu0 0.0
  %278 = vmatprep.mubr.f32.mxu0 0.0
  %279 = vmatmul.mubr.f32.gmra.mrb[0].mxu0 %v208
  %v280 = vpop.f32.mrb[0].mxu0
  %v281 = vadd.f32 0.0, %v280
  %v282 = vpop.f32.mrb[0].mxu0
  %283 = vdwg.mxu0
  %v284 = vld [vmem:[%s4] sm:$0xff]
  %v285 = vld [vmem:[%s4 + $0x8] sm:$0xff]
  %v286 = vld [vmem:[%s4 + $0x10] sm:$0xff]
  %v287 = vld [vmem:[%s4 + $0x18] sm:$0xff]
  %v288 = vld [vmem:[%s4 + $0x20] sm:$0xff]
  %v289 = vld [vmem:[%s4 + $0x28] sm:$0xff]
  %v290 = vld [vmem:[%s4 + $0x30] sm:$0xff]
  %v291 = vld [vmem:[%s4 + $0x38] sm:$0xff]
  %v292 = vld [vmem:[%s4 + $0x40] sm:$0xff]
  %v293 = vld [vmem:[%s4 + $0x48] sm:$0xff]
  %v294 = vld [vmem:[%s4 + $0x50] sm:$0xff]
  %v295 = vld [vmem:[%s4 + $0x58] sm:$0xff]
  %v296 = vld [vmem:[%s4 + $0x60] sm:$0xff]
  %v297 = vld [vmem:[%s4 + $0x68] sm:$0xff]
  %v298 = vld [vmem:[%s4 + $0x70] sm:$0xff]
  %v299 = vld [vmem:[%s4 + $0x78] sm:$0xff]
  %v300 = vld [vmem:[%s4 + $0x80] sm:$0xff]
  %v301 = vld [vmem:[%s4 + $0x88] sm:$0xff]
  %v302 = vld [vmem:[%s4 + $0x90] sm:$0xff]
  %v303 = vld [vmem:[%s4 + $0x98] sm:$0xff]
  %v304 = vld [vmem:[%s4 + $0xa0] sm:$0xff]
  %v305 = vld [vmem:[%s4 + $0xa8] sm:$0xff]
  %v306 = vld [vmem:[%s4 + $0xb0] sm:$0xff]
  %v307 = vld [vmem:[%s4 + $0xb8] sm:$0xff]
  %v308 = vld [vmem:[%s4 + $0xc0] sm:$0xff]
  %v309 = vld [vmem:[%s4 + $0xc8] sm:$0xff]
  %v310 = vld [vmem:[%s4 + $0xd0] sm:$0xff]
  %v311 = vld [vmem:[%s4 + $0xd8] sm:$0xff]
  %v312 = vld [vmem:[%s4 + $0xe0] sm:$0xff]
  %v313 = vld [vmem:[%s4 + $0xe8] sm:$0xff]
  %v314 = vld [vmem:[%s4 + $0xf0] sm:$0xff]
  %v315 = vld [vmem:[%s4 + $0xf8] sm:$0xff]
  %v316 = vld [vmem:[%s4 + $0x100] sm:$0xff]
  %v317 = vld [vmem:[%s4 + $0x108] sm:$0xff]
  %v318 = vld [vmem:[%s4 + $0x110] sm:$0xff]
  %v319 = vld [vmem:[%s4 + $0x118] sm:$0xff]
  %v320 = vld [vmem:[%s4 + $0x120] sm:$0xff]
  %v321 = vld [vmem:[%s4 + $0x128] sm:$0xff]
  %v322 = vld [vmem:[%s4 + $0x130] sm:$0xff]
  %v323 = vld [vmem:[%s4 + $0x138] sm:$0xff]
  %v324 = vld [vmem:[%s4 + $0x140] sm:$0xff]
  %v325 = vld [vmem:[%s4 + $0x148] sm:$0xff]
  %v326 = vld [vmem:[%s4 + $0x150] sm:$0xff]
  %v327 = vld [vmem:[%s4 + $0x158] sm:$0xff]
  %v328 = vld [vmem:[%s4 + $0x160] sm:$0xff]
  %v329 = vld [vmem:[%s4 + $0x168] sm:$0xff]
  %v330 = vld [vmem:[%s4 + $0x170] sm:$0xff]
  %v331 = vld [vmem:[%s4 + $0x178] sm:$0xff]
  %v332 = vld [vmem:[%s4 + $0x180] sm:$0xff]
  %v333 = vld [vmem:[%s4 + $0x188] sm:$0xff]
  %v334 = vld [vmem:[%s4 + $0x190] sm:$0xff]
  %v335 = vld [vmem:[%s4 + $0x198] sm:$0xff]
  %v336 = vld [vmem:[%s4 + $0x1a0] sm:$0xff]
  %v337 = vld [vmem:[%s4 + $0x1a8] sm:$0xff]
  %v338 = vld [vmem:[%s4 + $0x1b0] sm:$0xff]
  %v339 = vld [vmem:[%s4 + $0x1b8] sm:$0xff]
  %v340 = vld [vmem:[%s4 + $0x1c0] sm:$0xff]
  %v341 = vld [vmem:[%s4 + $0x1c8] sm:$0xff]
  %v342 = vld [vmem:[%s4 + $0x1d0] sm:$0xff]
  %v343 = vld [vmem:[%s4 + $0x1d8] sm:$0xff]
  %v344 = vld [vmem:[%s4 + $0x1e0] sm:$0x1f]
  %v345 = vld [vmem:[%s4 + $0x1e8] sm:$0x1f]
  %v346 = vld [vmem:[%s4 + $0x1f0] sm:$0x1f]
  %v347 = vld [vmem:[%s4 + $0x1f8] sm:$0x1f]
  %vm348 = vcmask 1022976
  %v350 = vsel %vm348, %v281, 0
  %v353 = vsel %vm210, %v344, 0
  %v356 = vsel %vm210, %v345, 0
  %v359 = vsel %vm210, %v346, 0
  %v362 = vsel %vm210, %v347, 0
  %364 = vmatprep.subr.mxu0 %v285
  %365 = vmatpush1.msra.mxu0 %v284
  %366 = vmatprep.subr.mxu0 %v289
  %367 = vmatpush1.msra.mxu0 %v288
  %368 = vmatprep.subr.mxu0 %v293
  %369 = vmatpush1.msra.mxu0 %v292
  %370 = vmatprep.subr.mxu0 %v297
  %371 = vmatpush1.msra.mxu0 %v296
  %372 = vmatprep.subr.mxu0 %v301
  %373 = vmatpush1.msra.mxu0 %v300
  %374 = vmatprep.subr.mxu0 %v305
  %375 = vmatpush1.msra.mxu0 %v304
  %376 = vmatprep.subr.mxu0 %v309
  %377 = vmatpush1.msra.mxu0 %v308
  %378 = vmatprep.subr.mxu0 %v313
  %379 = vmatpush1.msra.mxu0 %v312
  %380 = vmatprep.subr.mxu0 %v317
  %381 = vmatpush1.msra.mxu0 %v316
  %382 = vmatprep.subr.mxu0 %v321
  %383 = vmatpush1.msra.mxu0 %v320
  %384 = vmatprep.subr.mxu0 %v325
  %385 = vmatpush1.msra.mxu0 %v324
  %386 = vmatprep.subr.mxu0 %v329
  %387 = vmatpush1.msra.mxu0 %v328
  %388 = vmatprep.subr.mxu0 %v333
  %389 = vmatpush1.msra.mxu0 %v332
  %390 = vmatprep.subr.mxu0 %v337
  %391 = vmatpush1.msra.mxu0 %v336
  %392 = vmatprep.subr.mxu0 %v341
  %393 = vmatpush1.msra.mxu0 %v340
  %394 = vmatprep.subr.mxu0 %v356
  %395 = vmatpush1.msra.mxu0 %v353
  %396 = vmatprep.subr.mxu0 0.0
  %397 = vmatpush1.msra.mxu0 0.0
  %398 = vmatprep.subr.mxu0 0.0
  %399 = vmatpush1.msra.mxu0 0.0
  %400 = vmatprep.subr.mxu0 0.0
  %401 = vmatpush1.msra.mxu0 0.0
  %402 = vmatprep.subr.mxu0 0.0
  %403 = vmatpush1.msra.mxu0 0.0
  %404 = vmatprep.subr.mxu0 0.0
  %405 = vmatpush1.msra.mxu0 0.0
  %406 = vmatprep.subr.mxu0 0.0
  %407 = vmatpush1.msra.mxu0 0.0
  %408 = vmatprep.subr.mxu0 0.0
  %409 = vmatpush1.msra.mxu0 0.0
  %410 = vmatprep.subr.mxu0 0.0
  %411 = vmatpush1.msra.mxu0 0.0
  %412 = vmatprep.subr.mxu0 0.0
  %413 = vmatpush1.msra.mxu0 0.0
  %414 = vmatprep.subr.mxu0 0.0
  %415 = vmatpush1.msra.mxu0 0.0
  %416 = vmatprep.subr.mxu0 0.0
  %417 = vmatpush1.msra.mxu0 0.0
  %418 = vmatprep.subr.mxu0 0.0
  %419 = vmatpush1.msra.mxu0 0.0
  %420 = vmatprep.subr.mxu0 0.0
  %421 = vmatpush1.msra.mxu0 0.0
  %422 = vmatprep.subr.mxu0 0.0
  %423 = vmatpush1.msra.mxu0 0.0
  %424 = vmatprep.subr.mxu0 0.0
  %425 = vmatpush1.msra.mxu0 0.0
  %426 = vmatprep.subr.mxu0 0.0
  %427 = vmatpush1.msra.mxu0 0.0
  %428 = vmatprep.mubr.f32.mxu0 0.0
  %429 = vmatmul.mubr.f32.gmra.mrb[0].mxu0 %v350
  %v430 = vpop.f32.mrb[0].mxu0
  %v431 = vadd.f32 0.0, %v430
  %v432 = vpop.f32.mrb[0].mxu0
  %v433 = vadd.f32 0.0, %v432
  %434 = vdwg.mxu0
  %435 = vmatprep.subr.mxu0 %v287
  %436 = vmatpush1.msra.mxu0 %v286
  %437 = vmatprep.subr.mxu0 %v291
  %438 = vmatpush1.msra.mxu0 %v290
  %439 = vmatprep.subr.mxu0 %v295
  %440 = vmatpush1.msra.mxu0 %v294
  %441 = vmatprep.subr.mxu0 %v299
  %442 = vmatpush1.msra.mxu0 %v298
  %443 = vmatprep.subr.mxu0 %v303
  %444 = vmatpush1.msra.mxu0 %v302
  %445 = vmatprep.subr.mxu0 %v307
  %446 = vmatpush1.msra.mxu0 %v306
  %447 = vmatprep.subr.mxu0 %v311
  %448 = vmatpush1.msra.mxu0 %v310
  %449 = vmatprep.subr.mxu0 %v315
  %450 = vmatpush1.msra.mxu0 %v314
  %451 = vmatprep.subr.mxu0 %v319
  %452 = vmatpush1.msra.mxu0 %v318
  %453 = vmatprep.subr.mxu0 %v323
  %454 = vmatpush1.msra.mxu0 %v322
  %455 = vmatprep.subr.mxu0 %v327
  %456 = vmatpush1.msra.mxu0 %v326
  %457 = vmatprep.subr.mxu0 %v331
  %458 = vmatpush1.msra.mxu0 %v330
  %459 = vmatprep.subr.mxu0 %v335
  %460 = vmatpush1.msra.mxu0 %v334
  %461 = vmatprep.subr.mxu0 %v339
  %462 = vmatpush1.msra.mxu0 %v338
  %463 = vmatprep.subr.mxu0 %v343
  %464 = vmatpush1.msra.mxu0 %v342
  %465 = vmatprep.subr.mxu0 %v362
  %466 = vmatpush1.msra.mxu0 %v359
  %467 = vmatprep.subr.mxu0 0.0
  %468 = vmatpush1.msra.mxu0 0.0
  %469 = vmatprep.subr.mxu0 0.0
  %470 = vmatpush1.msra.mxu0 0.0
  %471 = vmatprep.subr.mxu0 0.0
  %472 = vmatpush1.msra.mxu0 0.0
  %473 = vmatprep.subr.mxu0 0.0
  %474 = vmatpush1.msra.mxu0 0.0
  %475 = vmatprep.subr.mxu0 0.0
  %476 = vmatpush1.msra.mxu0 0.0
  %477 = vmatprep.subr.mxu0 0.0
  %478 = vmatpush1.msra.mxu0 0.0
  %479 = vmatprep.subr.mxu0 0.0
  %480 = vmatpush1.msra.mxu0 0.0
  %481 = vmatprep.subr.mxu0 0.0
  %482 = vmatpush1.msra.mxu0 0.0
  %483 = vmatprep.subr.mxu0 0.0
  %484 = vmatpush1.msra.mxu0 0.0
  %485 = vmatprep.subr.mxu0 0.0
  %486 = vmatpush1.msra.mxu0 0.0
  %487 = vmatprep.subr.mxu0 0.0
  %488 = vmatpush1.msra.mxu0 0.0
  %489 = vmatprep.subr.mxu0 0.0
  %490 = vmatpush1.msra.mxu0 0.0
  %491 = vmatprep.subr.mxu0 0.0
  %492 = vmatpush1.msra.mxu0 0.0
  %493 = vmatprep.subr.mxu0 0.0
  %494 = vmatpush1.msra.mxu0 0.0
  %495 = vmatprep.subr.mxu0 0.0
  %496 = vmatpush1.msra.mxu0 0.0
  %497 = vmatprep.subr.mxu0 0.0
  %498 = vmatpush1.msra.mxu0 0.0
  %499 = vmatprep.mubr.f32.mxu0 0.0
  %500 = vmatmul.mubr.f32.gmra.mrb[0].mxu0 %v350
  %v501 = vpop.f32.mrb[0].mxu0
  %v502 = vadd.f32 0.0, %v501
  %v503 = vpop.f32.mrb[0].mxu0
  %v504 = vadd.f32 0.0, %v503
  %505 = vdwg.mxu0
  %v506 = vld [vmem:[%s5] sm:$0xff]
  %v507 = vld [vmem:[%s5 + $0x8] sm:$0xff]
  %v508 = vld [vmem:[%s5 + $0x10] sm:$0xff]
  %v509 = vld [vmem:[%s5 + $0x18] sm:$0xff]
  %v510 = vld [vmem:[%s5 + $0x20] sm:$0x1]
  %v511 = vld [vmem:[%s5 + $0x28] sm:$0x1]
  %v512 = vld [vmem:[%s5 + $0x30] sm:$0x1]
  %v513 = vld [vmem:[%s5 + $0x38] sm:$0x1]
  %v514 = vlaneseq
  %v515 = vshrl.u32 %v514, 7
  %v516 = vsub.s32 0, %v515
  %v517 = vrot.slane %v506, %v516
  %v518 = vlaneseq
  %v519 = vshrl.u32 %v518, 7
  %v520 = vsub.s32 0, %v519
  %v521 = vrot.slane %v507, %v520
  %v522 = vlaneseq
  %v523 = vshrl.u32 %v522, 7
  %v524 = vsub.s32 0, %v523
  %v525 = vrot.slane %v508, %v524
  %v526 = vlaneseq
  %v527 = vshrl.u32 %v526, 7
  %v528 = vsub.s32 0, %v527
  %v529 = vrot.slane %v509, %v528
  %v530 = vmul.f32 %v517, %v431
  %v531 = vmul.f32 %v521, %v433
  %v532 = vmul.f32 %v525, %v502
  %v533 = vmul.f32 %v529, %v504
  %v534 = vlaneseq
  %v535 = vshrl.u32 %v534, 7
  %v536 = vsub.s32 1, %v535
  %v537 = vrot.slane %v506, %v536
  %v538 = vlaneseq
  %v539 = vshrl.u32 %v538, 7
  %v540 = vsub.s32 1, %v539
  %v541 = vrot.slane %v507, %v540
  %v542 = vlaneseq
  %v543 = vshrl.u32 %v542, 7
  %v544 = vsub.s32 1, %v543
  %v545 = vrot.slane %v508, %v544
  %v546 = vlaneseq
  %v547 = vshrl.u32 %v546, 7
  %v548 = vsub.s32 1, %v547
  %v549 = vrot.slane %v509, %v548
  %554 = vrot.lane.b32.xlu0 %v431, 127
  %v555 = vpop.permute.xlu0 %554
  %556 = vrot.lane.b32.xlu0 %v433, 127
  %v557 = vpop.permute.xlu0 %556
  %558 = vrot.lane.b32.xlu0 %v502, 127
  %v559 = vpop.permute.xlu0 %558
  %560 = vrot.lane.b32.xlu0 %v504, 127
  %v561 = vpop.permute.xlu0 %560
  %vm562 = vcmask 1039360
  %v563 = vsel %vm562, %v555, %v557
  %v564 = vsel %vm562, %v557, %v559
  %v565 = vsel %vm562, %v559, %v561
  %v570 = vmul.f32 %v537, %v563
  %v571 = vmul.f32 %v541, %v564
  %v572 = vmul.f32 %v545, %v565
  %v573 = vmul.f32 %v549, %v561
  %v574 = vadd.f32 %v530, %v570
  %v575 = vadd.f32 %v531, %v571
  %v576 = vadd.f32 %v532, %v572
  %v577 = vadd.f32 %v533, %v573
  %v578 = vlaneseq
  %v579 = vshrl.u32 %v578, 7
  %v580 = vsub.s32 2, %v579
  %v581 = vrot.slane %v506, %v580
  %v582 = vlaneseq
  %v583 = vshrl.u32 %v582, 7
  %v584 = vsub.s32 2, %v583
  %v585 = vrot.slane %v507, %v584
  %v586 = vlaneseq
  %v587 = vshrl.u32 %v586, 7
  %v588 = vsub.s32 2, %v587
  %v589 = vrot.slane %v508, %v588
  %v590 = vlaneseq
  %v591 = vshrl.u32 %v590, 7
  %v592 = vsub.s32 2, %v591
  %v593 = vrot.slane %v509, %v592
  %594 = vrot.lane.b32.xlu0 %v431, 126
  %v595 = vpop.permute.xlu0 %594
  %596 = vrot.lane.b32.xlu0 %v433, 126
  %v597 = vpop.permute.xlu0 %596
  %598 = vrot.lane.b32.xlu0 %v502, 126
  %v599 = vpop.permute.xlu0 %598
  %600 = vrot.lane.b32.xlu0 %v504, 126
  %v601 = vpop.permute.xlu0 %600
  %vm602 = vcmask 1031168
  %v603 = vsel %vm602, %v595, %v597
  %v604 = vsel %vm602, %v597, %v599
  %v605 = vsel %vm602, %v599, %v601
  %v610 = vmul.f32 %v581, %v603
  %v611 = vmul.f32 %v585, %v604
  %v612 = vmul.f32 %v589, %v605
  %v613 = vmul.f32 %v593, %v601
  %v614 = vadd.f32 %v574, %v610
  %v615 = vadd.f32 %v575, %v611
  %v616 = vadd.f32 %v576, %v612
  %v617 = vadd.f32 %v577, %v613
  %v618 = vlaneseq
  %v619 = vshrl.u32 %v618, 7
  %v620 = vsub.s32 3, %v619
  %v621 = vrot.slane %v506, %v620
  %v622 = vlaneseq
  %v623 = vshrl.u32 %v622, 7
  %v624 = vsub.s32 3, %v623
  %v625 = vrot.slane %v507, %v624
  %v626 = vlaneseq
  %v627 = vshrl.u32 %v626, 7
  %v628 = vsub.s32 3, %v627
  %v629 = vrot.slane %v508, %v628
  %v630 = vlaneseq
  %v631 = vshrl.u32 %v630, 7
  %v632 = vsub.s32 3, %v631
  %v633 = vrot.slane %v509, %v632
  %v634 = vmul.f32 %v621, %v431
  %v635 = vmul.f32 %v625, %v433
  %v636 = vmul.f32 %v629, %v502
  %v637 = vmul.f32 %v633, %v504
  %v642 = vrot.slane %v634, 1
  %v643 = vrot.slane %v635, 1
  %v644 = vrot.slane %v636, 1
  %v645 = vrot.slane %v637, 1
  %v650 = vadd.f32 %v614, %v642
  %v651 = vadd.f32 %v615, %v643
  %v652 = vadd.f32 %v616, %v644
  %v653 = vadd.f32 %v617, %v645
  %v654 = vlaneseq
  %v655 = vshrl.u32 %v654, 7
  %v656 = vsub.s32 4, %v655
  %v657 = vrot.slane %v506, %v656
  %v658 = vlaneseq
  %v659 = vshrl.u32 %v658, 7
  %v660 = vsub.s32 4, %v659
  %v661 = vrot.slane %v507, %v660
  %v662 = vlaneseq
  %v663 = vshrl.u32 %v662, 7
  %v664 = vsub.s32 4, %v663
  %v665 = vrot.slane %v508, %v664
  %v666 = vlaneseq
  %v667 = vshrl.u32 %v666, 7
  %v668 = vsub.s32 4, %v667
  %v669 = vrot.slane %v509, %v668
  %v670 = vrot.slane %v431, 1
  %v671 = vrot.slane %v433, 1
  %v672 = vrot.slane %v502, 1
  %v673 = vrot.slane %v504, 1
  %674 = vrot.lane.b32.xlu0 %v670, 127
  %v675 = vpop.permute.xlu0 %674
  %676 = vrot.lane.b32.xlu0 %v671, 127
  %v677 = vpop.permute.xlu0 %676
  %678 = vrot.lane.b32.xlu0 %v672, 127
  %v679 = vpop.permute.xlu0 %678
  %680 = vrot.lane.b32.xlu0 %v673, 127
  %v681 = vpop.permute.xlu0 %680
  %v682 = vsel %vm562, %v675, %v677
  %v683 = vsel %vm562, %v677, %v679
  %v684 = vsel %vm562, %v679, %v681
  %v689 = vmul.f32 %v657, %v682
  %v690 = vmul.f32 %v661, %v683
  %v691 = vmul.f32 %v665, %v684
  %v692 = vmul.f32 %v669, %v681
  %v693 = vadd.f32 %v650, %v689
  %v694 = vadd.f32 %v651, %v690
  %v695 = vadd.f32 %v652, %v691
  %v696 = vadd.f32 %v653, %v692
  %v697 = vlaneseq
  %v698 = vshrl.u32 %v697, 7
  %v699 = vsub.s32 5, %v698
  %v700 = vrot.slane %v506, %v699
  %v701 = vlaneseq
  %v702 = vshrl.u32 %v701, 7
  %v703 = vsub.s32 5, %v702
  %v704 = vrot.slane %v507, %v703
  %v705 = vlaneseq
  %v706 = vshrl.u32 %v705, 7
  %v707 = vsub.s32 5, %v706
  %v708 = vrot.slane %v508, %v707
  %v709 = vlaneseq
  %v710 = vshrl.u32 %v709, 7
  %v711 = vsub.s32 5, %v710
  %v712 = vrot.slane %v509, %v711
  %713 = vrot.lane.b32.xlu0 %v670, 126
  %v714 = vpop.permute.xlu0 %713
  %715 = vrot.lane.b32.xlu0 %v671, 126
  %v716 = vpop.permute.xlu0 %715
  %717 = vrot.lane.b32.xlu0 %v672, 126
  %v718 = vpop.permute.xlu0 %717
  %719 = vrot.lane.b32.xlu0 %v673, 126
  %v720 = vpop.permute.xlu0 %719
  %v721 = vsel %vm602, %v714, %v716
  %v722 = vsel %vm602, %v716, %v718
  %v723 = vsel %vm602, %v718, %v720
  %v728 = vmul.f32 %v700, %v721
  %v729 = vmul.f32 %v704, %v722
  %v730 = vmul.f32 %v708, %v723
  %v731 = vmul.f32 %v712, %v720
  %v732 = vadd.f32 %v693, %v728
  %v733 = vadd.f32 %v694, %v729
  %v734 = vadd.f32 %v695, %v730
  %v735 = vadd.f32 %v696, %v731
  %v736 = vlaneseq
  %v737 = vshrl.u32 %v736, 7
  %v738 = vsub.s32 6, %v737
  %v739 = vrot.slane %v506, %v738
  %v740 = vlaneseq
  %v741 = vshrl.u32 %v740, 7
  %v742 = vsub.s32 6, %v741
  %v743 = vrot.slane %v507, %v742
  %v744 = vlaneseq
  %v745 = vshrl.u32 %v744, 7
  %v746 = vsub.s32 6, %v745
  %v747 = vrot.slane %v508, %v746
  %v748 = vlaneseq
  %v749 = vshrl.u32 %v748, 7
  %v750 = vsub.s32 6, %v749
  %v751 = vrot.slane %v509, %v750
  %v752 = vmul.f32 %v739, %v431
  %v753 = vmul.f32 %v743, %v433
  %v754 = vmul.f32 %v747, %v502
  %v755 = vmul.f32 %v751, %v504
  %v760 = vrot.slane %v752, 2
  %v761 = vrot.slane %v753, 2
  %v762 = vrot.slane %v754, 2
  %v763 = vrot.slane %v755, 2
  %v768 = vadd.f32 %v732, %v760
  %v769 = vadd.f32 %v733, %v761
  %v770 = vadd.f32 %v734, %v762
  %v771 = vadd.f32 %v735, %v763
  %v772 = vlaneseq
  %v773 = vshrl.u32 %v772, 7
  %v774 = vsub.s32 7, %v773
  %v775 = vrot.slane %v506, %v774
  %v776 = vlaneseq
  %v777 = vshrl.u32 %v776, 7
  %v778 = vsub.s32 7, %v777
  %v779 = vrot.slane %v507, %v778
  %v780 = vlaneseq
  %v781 = vshrl.u32 %v780, 7
  %v782 = vsub.s32 7, %v781
  %v783 = vrot.slane %v508, %v782
  %v784 = vlaneseq
  %v785 = vshrl.u32 %v784, 7
  %v786 = vsub.s32 7, %v785
  %v787 = vrot.slane %v509, %v786
  %v788 = vrot.slane %v431, 2
  %v789 = vrot.slane %v433, 2
  %v790 = vrot.slane %v502, 2
  %v791 = vrot.slane %v504, 2
  %792 = vrot.lane.b32.xlu0 %v788, 127
  %v793 = vpop.permute.xlu0 %792
  %794 = vrot.lane.b32.xlu0 %v789, 127
  %v795 = vpop.permute.xlu0 %794
  %796 = vrot.lane.b32.xlu0 %v790, 127
  %v797 = vpop.permute.xlu0 %796
  %798 = vrot.lane.b32.xlu0 %v791, 127
  %v799 = vpop.permute.xlu0 %798
  %v800 = vsel %vm562, %v793, %v795
  %v801 = vsel %vm562, %v795, %v797
  %v802 = vsel %vm562, %v797, %v799
  %v807 = vmul.f32 %v775, %v800
  %v808 = vmul.f32 %v779, %v801
  %v809 = vmul.f32 %v783, %v802
  %v810 = vmul.f32 %v787, %v799
  %v811 = vadd.f32 %v768, %v807
  %v812 = vadd.f32 %v769, %v808
  %v813 = vadd.f32 %v770, %v809
  %v814 = vadd.f32 %v771, %v810
  %v815 = vlaneseq
  %v816 = vshrl.u32 %v815, 7
  %v817 = vsub.s32 0, %v816
  %v818 = vrot.slane %v510, %v817
  %v819 = vlaneseq
  %v820 = vshrl.u32 %v819, 7
  %v821 = vsub.s32 0, %v820
  %v822 = vrot.slane %v511, %v821
  %v823 = vlaneseq
  %v824 = vshrl.u32 %v823, 7
  %v825 = vsub.s32 0, %v824
  %v826 = vrot.slane %v512, %v825
  %v827 = vlaneseq
  %v828 = vshrl.u32 %v827, 7
  %v829 = vsub.s32 0, %v828
  %v830 = vrot.slane %v513, %v829
  %831 = vrot.lane.b32.xlu0 %v788, 126
  %v832 = vpop.permute.xlu0 %831
  %833 = vrot.lane.b32.xlu0 %v789, 126
  %v834 = vpop.permute.xlu0 %833
  %835 = vrot.lane.b32.xlu0 %v790, 126
  %v836 = vpop.permute.xlu0 %835
  %837 = vrot.lane.b32.xlu0 %v791, 126
  %v838 = vpop.permute.xlu0 %837
  %v839 = vsel %vm602, %v832, %v834
  %v840 = vsel %vm602, %v834, %v836
  %v841 = vsel %vm602, %v836, %v838
  %v846 = vmul.f32 %v818, %v839
  %v847 = vmul.f32 %v822, %v840
  %v848 = vmul.f32 %v826, %v841
  %v849 = vmul.f32 %v830, %v838
  %v850 = vadd.f32 %v811, %v846
  %v851 = vadd.f32 %v812, %v847
  %v852 = vadd.f32 %v813, %v848
  %v853 = vadd.f32 %v814, %v849
  %v854 = vld [vmem:[%s6] sm:$0xff]
  %v855 = vld [vmem:[%s6 + $0x8] sm:$0xff]
  %v856 = vld [vmem:[%s6 + $0x10] sm:$0xff]
  %v857 = vld [vmem:[%s6 + $0x18] sm:$0xff]
  %v858 = vld [vmem:[%s6 + $0x20] sm:$0xff]
  %v859 = vld [vmem:[%s6 + $0x28] sm:$0xff]
  %v860 = vld [vmem:[%s6 + $0x30] sm:$0xff]
  %v861 = vld [vmem:[%s6 + $0x38] sm:$0xff]
  %v862 = vld [vmem:[%s6 + $0x40] sm:$0xff]
  %v863 = vld [vmem:[%s6 + $0x48] sm:$0xff]
  %v864 = vld [vmem:[%s6 + $0x50] sm:$0xff]
  %v865 = vld [vmem:[%s6 + $0x58] sm:$0xff]
  %v866 = vld [vmem:[%s6 + $0x60] sm:$0xff]
  %v867 = vld [vmem:[%s6 + $0x68] sm:$0xff]
  %v868 = vld [vmem:[%s6 + $0x70] sm:$0xff]
  %v869 = vld [vmem:[%s6 + $0x78] sm:$0xff]
  %v870 = vld [vmem:[%s6 + $0x80] sm:$0xff]
  %v871 = vld [vmem:[%s6 + $0x88] sm:$0xff]
  %v872 = vld [vmem:[%s6 + $0x90] sm:$0xff]
  %v873 = vld [vmem:[%s6 + $0x98] sm:$0xff]
  %v874 = vld [vmem:[%s6 + $0xa0] sm:$0xff]
  %v875 = vld [vmem:[%s6 + $0xa8] sm:$0xff]
  %v876 = vld [vmem:[%s6 + $0xb0] sm:$0xff]
  %v877 = vld [vmem:[%s6 + $0xb8] sm:$0xff]
  %v878 = vld [vmem:[%s6 + $0xc0] sm:$0xff]
  %v879 = vld [vmem:[%s6 + $0xc8] sm:$0xff]
  %v880 = vld [vmem:[%s6 + $0xd0] sm:$0xff]
  %v881 = vld [vmem:[%s6 + $0xd8] sm:$0xff]
  %v882 = vld [vmem:[%s6 + $0xe0] sm:$0xff]
  %v883 = vld [vmem:[%s6 + $0xe8] sm:$0xff]
  %v884 = vld [vmem:[%s6 + $0xf0] sm:$0xff]
  %v885 = vld [vmem:[%s6 + $0xf8] sm:$0xff]
  %v886 = vld [vmem:[%s6 + $0x100] sm:$0xff]
  %v887 = vld [vmem:[%s6 + $0x108] sm:$0xff]
  %v888 = vld [vmem:[%s6 + $0x110] sm:$0xff]
  %v889 = vld [vmem:[%s6 + $0x118] sm:$0xff]
  %v890 = vld [vmem:[%s6 + $0x120] sm:$0xff]
  %v891 = vld [vmem:[%s6 + $0x128] sm:$0xff]
  %v892 = vld [vmem:[%s6 + $0x130] sm:$0xff]
  %v893 = vld [vmem:[%s6 + $0x138] sm:$0xff]
  %v894 = vld [vmem:[%s6 + $0x140] sm:$0xff]
  %v895 = vld [vmem:[%s6 + $0x148] sm:$0xff]
  %v896 = vld [vmem:[%s6 + $0x150] sm:$0xff]
  %v897 = vld [vmem:[%s6 + $0x158] sm:$0xff]
  %v898 = vld [vmem:[%s6 + $0x160] sm:$0xff]
  %v899 = vld [vmem:[%s6 + $0x168] sm:$0xff]
  %v900 = vld [vmem:[%s6 + $0x170] sm:$0xff]
  %v901 = vld [vmem:[%s6 + $0x178] sm:$0xff]
  %v902 = vld [vmem:[%s6 + $0x180] sm:$0xff]
  %v903 = vld [vmem:[%s6 + $0x188] sm:$0xff]
  %v904 = vld [vmem:[%s6 + $0x190] sm:$0xff]
  %v905 = vld [vmem:[%s6 + $0x198] sm:$0xff]
  %v906 = vld [vmem:[%s6 + $0x1a0] sm:$0xff]
  %v907 = vld [vmem:[%s6 + $0x1a8] sm:$0xff]
  %v908 = vld [vmem:[%s6 + $0x1b0] sm:$0xff]
  %v909 = vld [vmem:[%s6 + $0x1b8] sm:$0x3f]
  %v910 = vld [vmem:[%s7] sm:$0x1]
  %v912 = vlaneseq
  %v913 = vshrl.u32 %v912, 7
  %v914 = vsub.s32 0, %v913
  %v915 = vrot.slane %v910, %v914
  %vm917 = vcmask 506880
  %v919 = vsel %vm917, %v853, 0
  %v922 = vsel %vm136, %v909, 0
  %924 = vmatprep.subr.mxu0 0.0
  %925 = vmatpush1.msra.mxu0 %v854
  %926 = vmatprep.subr.mxu0 0.0
  %927 = vmatpush1.msra.mxu0 %v855
  %928 = vmatprep.subr.mxu0 0.0
  %929 = vmatpush1.msra.mxu0 %v856
  %930 = vmatprep.subr.mxu0 0.0
  %931 = vmatpush1.msra.mxu0 %v857
  %932 = vmatprep.subr.mxu0 0.0
  %933 = vmatpush1.msra.mxu0 %v858
  %934 = vmatprep.subr.mxu0 0.0
  %935 = vmatpush1.msra.mxu0 %v859
  %936 = vmatprep.subr.mxu0 0.0
  %937 = vmatpush1.msra.mxu0 %v860
  %938 = vmatprep.subr.mxu0 0.0
  %939 = vmatpush1.msra.mxu0 %v861
  %940 = vmatprep.subr.mxu0 0.0
  %941 = vmatpush1.msra.mxu0 %v862
  %942 = vmatprep.subr.mxu0 0.0
  %943 = vmatpush1.msra.mxu0 %v863
  %944 = vmatprep.subr.mxu0 0.0
  %945 = vmatpush1.msra.mxu0 %v864
  %946 = vmatprep.subr.mxu0 0.0
  %947 = vmatpush1.msra.mxu0 %v865
  %948 = vmatprep.subr.mxu0 0.0
  %949 = vmatpush1.msra.mxu0 %v866
  %950 = vmatprep.subr.mxu0 0.0
  %951 = vmatpush1.msra.mxu0 %v867
  %952 = vmatprep.subr.mxu0 0.0
  %953 = vmatpush1.msra.mxu0 %v868
  %954 = vmatprep.subr.mxu0 0.0
  %955 = vmatpush1.msra.mxu0 %v869
  %956 = vmatprep.subr.mxu0 0.0
  %957 = vmatpush1.msra.mxu0 %v870
  %958 = vmatprep.subr.mxu0 0.0
  %959 = vmatpush1.msra.mxu0 %v871
  %960 = vmatprep.subr.mxu0 0.0
  %961 = vmatpush1.msra.mxu0 %v872
  %962 = vmatprep.subr.mxu0 0.0
  %963 = vmatpush1.msra.mxu0 %v873
  %964 = vmatprep.subr.mxu0 0.0
  %965 = vmatpush1.msra.mxu0 %v874
  %966 = vmatprep.subr.mxu0 0.0
  %967 = vmatpush1.msra.mxu0 %v875
  %968 = vmatprep.subr.mxu0 0.0
  %969 = vmatpush1.msra.mxu0 %v876
  %970 = vmatprep.subr.mxu0 0.0
  %971 = vmatpush1.msra.mxu0 %v877
  %972 = vmatprep.subr.mxu0 0.0
  %973 = vmatpush1.msra.mxu0 %v878
  %974 = vmatprep.subr.mxu0 0.0
  %975 = vmatpush1.msra.mxu0 %v879
  %976 = vmatprep.subr.mxu0 0.0
  %977 = vmatpush1.msra.mxu0 %v880
  %978 = vmatprep.subr.mxu0 0.0
  %979 = vmatpush1.msra.mxu0 %v881
  %980 = vmatprep.subr.mxu0 0.0
  %981 = vmatpush1.msra.mxu0 %v882
  %982 = vmatprep.subr.mxu0 0.0
  %983 = vmatpush1.msra.mxu0 %v883
  %984 = vmatprep.subr.mxu0 0.0
  %985 = vmatpush1.msra.mxu0 %v884
  %986 = vmatprep.subr.mxu0 0.0
  %987 = vmatpush1.msra.mxu0 %v885
  %988 = vmatprep.mubr.f32.mxu0 %v851
  %989 = vmatmul.mubr.f32.gmra.mrb[0].mxu0 %v850
  %v990 = vpop.f32.mrb[0].mxu0
  %v991 = vadd.f32 %v915, %v990
  %v992 = vpop.f32.mrb[0].mxu0
  %993 = vdwg.mxu0
  %994 = vmatprep.subr.mxu0 0.0
  %995 = vmatpush1.msra.mxu0 %v886
  %996 = vmatprep.subr.mxu0 0.0
  %997 = vmatpush1.msra.mxu0 %v887
  %998 = vmatprep.subr.mxu0 0.0
  %999 = vmatpush1.msra.mxu0 %v888
  %1000 = vmatprep.subr.mxu0 0.0
  %1001 = vmatpush1.msra.mxu0 %v889
  %1002 = vmatprep.subr.mxu0 0.0
  %1003 = vmatpush1.msra.mxu0 %v890
  %1004 = vmatprep.subr.mxu0 0.0
  %1005 = vmatpush1.msra.mxu0 %v891
  %1006 = vmatprep.subr.mxu0 0.0
  %1007 = vmatpush1.msra.mxu0 %v892
  %1008 = vmatprep.subr.mxu0 0.0
  %1009 = vmatpush1.msra.mxu0 %v893
  %1010 = vmatprep.subr.mxu0 0.0
  %1011 = vmatpush1.msra.mxu0 %v894
  %1012 = vmatprep.subr.mxu0 0.0
  %1013 = vmatpush1.msra.mxu0 %v895
  %1014 = vmatprep.subr.mxu0 0.0
  %1015 = vmatpush1.msra.mxu0 %v896
  %1016 = vmatprep.subr.mxu0 0.0
  %1017 = vmatpush1.msra.mxu0 %v897
  %1018 = vmatprep.subr.mxu0 0.0
  %1019 = vmatpush1.msra.mxu0 %v898
  %1020 = vmatprep.subr.mxu0 0.0
  %1021 = vmatpush1.msra.mxu0 %v899
  %1022 = vmatprep.subr.mxu0 0.0
  %1023 = vmatpush1.msra.mxu0 %v900
  %1024 = vmatprep.subr.mxu0 0.0
  %1025 = vmatpush1.msra.mxu0 %v901
  %1026 = vmatprep.subr.mxu0 0.0
  %1027 = vmatpush1.msra.mxu0 %v902
  %1028 = vmatprep.subr.mxu0 0.0
  %1029 = vmatpush1.msra.mxu0 %v903
  %1030 = vmatprep.subr.mxu0 0.0
  %1031 = vmatpush1.msra.mxu0 %v904
  %1032 = vmatprep.subr.mxu0 0.0
  %1033 = vmatpush1.msra.mxu0 %v905
  %1034 = vmatprep.subr.mxu0 0.0
  %1035 = vmatpush1.msra.mxu0 %v906
  %1036 = vmatprep.subr.mxu0 0.0
  %1037 = vmatpush1.msra.mxu0 %v907
  %1038 = vmatprep.subr.mxu0 0.0
  %1039 = vmatpush1.msra.mxu0 %v908
  %1040 = vmatprep.subr.mxu0 0.0
  %1041 = vmatpush1.msra.mxu0 %v922
  %1042 = vmatprep.subr.mxu0 0.0
  %1043 = vmatpush1.msra.mxu0 0.0
  %1044 = vmatprep.subr.mxu0 0.0
  %1045 = vmatpush1.msra.mxu0 0.0
  %1046 = vmatprep.subr.mxu0 0.0
  %1047 = vmatpush1.msra.mxu0 0.0
  %1048 = vmatprep.subr.mxu0 0.0
  %1049 = vmatpush1.msra.mxu0 0.0
  %1050 = vmatprep.subr.mxu0 0.0
  %1051 = vmatpush1.msra.mxu0 0.0
  %1052 = vmatprep.subr.mxu0 0.0
  %1053 = vmatpush1.msra.mxu0 0.0
  %1054 = vmatprep.subr.mxu0 0.0
  %1055 = vmatpush1.msra.mxu0 0.0
  %1056 = vmatprep.subr.mxu0 0.0
  %1057 = vmatpush1.msra.mxu0 0.0
  %1058 = vmatprep.mubr.f32.mxu0 %v919
  %1059 = vmatmul.mubr.f32.gmra.mrb[0].mxu0 %v852
  %v1060 = vpop.f32.mrb[0].mxu0
  %v1061 = vadd.f32 %v991, %v1060
  %v1062 = vpop.f32.mrb[0].mxu0
  %1063 = vdwg.mxu0
  %v1064 = vmax.f32 %v1061, 0.0
  %1066 = vrot.lane.b32.xlu0 %v1064, 127
  %v1067 = vpop.permute.xlu0 %1066
  %v1069 = vmax.f32 %v1064, %v1067
  %v1071 = vrot.slane %v1069, 1
  %v1073 = vmax.f32 %v1069, %v1071
  %v1074 = vld [vmem:[%s9] sm:$0x1]
  %v1075 = vld [vmem:[%s8] sm:$0xff]
  %v1076 = vld [vmem:[%s8 + $0x8] sm:$0xff]
  %v1077 = vld [vmem:[%s8 + $0x10] sm:$0xff]
  %v1078 = vld [vmem:[%s8 + $0x18] sm:$0xff]
  %v1079 = vld [vmem:[%s8 + $0x20] sm:$0xff]
  %v1080 = vld [vmem:[%s8 + $0x28] sm:$0xff]
  %v1081 = vld [vmem:[%s8 + $0x30] sm:$0xff]
  %v1082 = vld [vmem:[%s8 + $0x38] sm:$0xff]
  %v1083 = vld [vmem:[%s8 + $0x40] sm:$0xff]
  %v1084 = vld [vmem:[%s8 + $0x48] sm:$0x7f]
  %vm1085 = vcmask 646144
  %v1087 = vsel %vm1085, %v1073, 0
  %v1090 = vsel %vm89, %v1084, 0
  %1092 = vmatprep.subr.mxu0 0.0
  %1093 = vmatpush1.msra.mxu0 %v1075
  %1094 = vmatprep.subr.mxu0 0.0
  %1095 = vmatpush1.msra.mxu0 %v1076
  %1096 = vmatprep.subr.mxu0 0.0
  %1097 = vmatpush1.msra.mxu0 %v1077
  %1098 = vmatprep.subr.mxu0 0.0
  %1099 = vmatpush1.msra.mxu0 %v1078
  %1100 = vmatprep.subr.mxu0 0.0
  %1101 = vmatpush1.msra.mxu0 %v1079
  %1102 = vmatprep.subr.mxu0 0.0
  %1103 = vmatpush1.msra.mxu0 %v1080
  %1104 = vmatprep.subr.mxu0 0.0
  %1105 = vmatpush1.msra.mxu0 %v1081
  %1106 = vmatprep.subr.mxu0 0.0
  %1107 = vmatpush1.msra.mxu0 %v1082
  %1108 = vmatprep.subr.mxu0 0.0
  %1109 = vmatpush1.msra.mxu0 %v1083
  %1110 = vmatprep.subr.mxu0 0.0
  %1111 = vmatpush1.msra.mxu0 %v1090
  %1112 = vmatprep.subr.mxu0 0.0
  %1113 = vmatpush1.msra.mxu0 0.0
  %1114 = vmatprep.subr.mxu0 0.0
  %1115 = vmatpush1.msra.mxu0 0.0
  %1116 = vmatprep.subr.mxu0 0.0
  %1117 = vmatpush1.msra.mxu0 0.0
  %1118 = vmatprep.subr.mxu0 0.0
  %1119 = vmatpush1.msra.mxu0 0.0
  %1120 = vmatprep.subr.mxu0 0.0
  %1121 = vmatpush1.msra.mxu0 0.0
  %1122 = vmatprep.subr.mxu0 0.0
  %1123 = vmatpush1.msra.mxu0 0.0
  %1124 = vmatprep.subr.mxu0 0.0
  %1125 = vmatpush1.msra.mxu0 0.0
  %1126 = vmatprep.subr.mxu0 0.0
  %1127 = vmatpush1.msra.mxu0 0.0
  %1128 = vmatprep.subr.mxu0 0.0
  %1129 = vmatpush1.msra.mxu0 0.0
  %1130 = vmatprep.subr.mxu0 0.0
  %1131 = vmatpush1.msra.mxu0 0.0
  %1132 = vmatprep.subr.mxu0 0.0
  %1133 = vmatpush1.msra.mxu0 0.0
  %1134 = vmatprep.subr.mxu0 0.0
  %1135 = vmatpush1.msra.mxu0 0.0
  %1136 = vmatprep.subr.mxu0 0.0
  %1137 = vmatpush1.msra.mxu0 0.0
  %1138 = vmatprep.subr.mxu0 0.0
  %1139 = vmatpush1.msra.mxu0 0.0
  %1140 = vmatprep.subr.mxu0 0.0
  %1141 = vmatpush1.msra.mxu0 0.0
  %1142 = vmatprep.subr.mxu0 0.0
  %1143 = vmatpush1.msra.mxu0 0.0
  %1144 = vmatprep.subr.mxu0 0.0
  %1145 = vmatpush1.msra.mxu0 0.0
  %1146 = vmatprep.subr.mxu0 0.0
  %1147 = vmatpush1.msra.mxu0 0.0
  %1148 = vmatprep.subr.mxu0 0.0
  %1149 = vmatpush1.msra.mxu0 0.0
  %1150 = vmatprep.subr.mxu0 0.0
  %1151 = vmatpush1.msra.mxu0 0.0
  %1152 = vmatprep.subr.mxu0 0.0
  %1153 = vmatpush1.msra.mxu0 0.0
  %1154 = vmatprep.subr.mxu0 0.0
  %1155 = vmatpush1.msra.mxu0 0.0
  %1156 = vmatprep.mubr.f32.mxu0 0.0
  %1157 = vmatmul.mubr.f32.gmra.mrb[0].mxu0 %v1087
  %v1158 = vpop.f32.mrb[0].mxu0
  %v1159 = vadd.f32 0.0, %v1158
  %v1160 = vpop.f32.mrb[0].mxu0
  %1161 = vdwg.mxu0
  %v1162 = vadd.f32 %v1074, %v1159
  %s1163 = scalar_lea.vmem %s8, 80
  %v1164 = vld [vmem:[%s1163] sm:$0xff]
  %v1165 = vld [vmem:[%s1163 + $0x8] sm:$0xff]
  %v1166 = vld [vmem:[%s1163 + $0x10] sm:$0xff]
  %v1167 = vld [vmem:[%s1163 + $0x18] sm:$0xff]
  %v1168 = vld [vmem:[%s1163 + $0x20] sm:$0xff]
  %v1169 = vld [vmem:[%s1163 + $0x28] sm:$0xff]
  %v1170 = vld [vmem:[%s1163 + $0x30] sm:$0xff]
  %v1171 = vld [vmem:[%s1163 + $0x38] sm:$0xff]
  %v1172 = vld [vmem:[%s1163 + $0x40] sm:$0xff]
  %v1173 = vld [vmem:[%s1163 + $0x48] sm:$0x7f]
  %v1174 = vrot.slane %v1073, 2
  %v1175 = vsel %vm1085, %v1174, 0
  %v1178 = vsel %vm89, %v1173, 0
  %1180 = vmatprep.subr.mxu0 0.0
  %1181 = vmatpush1.msra.mxu0 %v1164
  %1182 = vmatprep.subr.mxu0 0.0
  %1183 = vmatpush1.msra.mxu0 %v1165
  %1184 = vmatprep.subr.mxu0 0.0
  %1185 = vmatpush1.msra.mxu0 %v1166
  %1186 = vmatprep.subr.mxu0 0.0
  %1187 = vmatpush1.msra.mxu0 %v1167
  %1188 = vmatprep.subr.mxu0 0.0
  %1189 = vmatpush1.msra.mxu0 %v1168
  %1190 = vmatprep.subr.mxu0 0.0
  %1191 = vmatpush1.msra.mxu0 %v1169
  %1192 = vmatprep.subr.mxu0 0.0
  %1193 = vmatpush1.msra.mxu0 %v1170
  %1194 = vmatprep.subr.mxu0 0.0
  %1195 = vmatpush1.msra.mxu0 %v1171
  %1196 = vmatprep.subr.mxu0 0.0
  %1197 = vmatpush1.msra.mxu0 %v1172
  %1198 = vmatprep.subr.mxu0 0.0
  %1199 = vmatpush1.msra.mxu0 %v1178
  %1200 = vmatprep.subr.mxu0 0.0
  %1201 = vmatpush1.msra.mxu0 0.0
  %1202 = vmatprep.subr.mxu0 0.0
  %1203 = vmatpush1.msra.mxu0 0.0
  %1204 = vmatprep.subr.mxu0 0.0
  %1205 = vmatpush1.msra.mxu0 0.0
  %1206 = vmatprep.subr.mxu0 0.0
  %1207 = vmatpush1.msra.mxu0 0.0
  %1208 = vmatprep.subr.mxu0 0.0
  %1209 = vmatpush1.msra.mxu0 0.0
  %1210 = vmatprep.subr.mxu0 0.0
  %1211 = vmatpush1.msra.mxu0 0.0
  %1212 = vmatprep.subr.mxu0 0.0
  %1213 = vmatpush1.msra.mxu0 0.0
  %1214 = vmatprep.subr.mxu0 0.0
  %1215 = vmatpush1.msra.mxu0 0.0
  %1216 = vmatprep.subr.mxu0 0.0
  %1217 = vmatpush1.msra.mxu0 0.0
  %1218 = vmatprep.subr.mxu0 0.0
  %1219 = vmatpush1.msra.mxu0 0.0
  %1220 = vmatprep.subr.mxu0 0.0
  %1221 = vmatpush1.msra.mxu0 0.0
  %1222 = vmatprep.subr.mxu0 0.0
  %1223 = vmatpush1.msra.mxu0 0.0
  %1224 = vmatprep.subr.mxu0 0.0
  %1225 = vmatpush1.msra.mxu0 0.0
  %1226 = vmatprep.subr.mxu0 0.0
  %1227 = vmatpush1.msra.mxu0 0.0
  %1228 = vmatprep.subr.mxu0 0.0
  %1229 = vmatpush1.msra.mxu0 0.0
  %1230 = vmatprep.subr.mxu0 0.0
  %1231 = vmatpush1.msra.mxu0 0.0
  %1232 = vmatprep.subr.mxu0 0.0
  %1233 = vmatpush1.msra.mxu0 0.0
  %1234 = vmatprep.subr.mxu0 0.0
  %1235 = vmatpush1.msra.mxu0 0.0
  %1236 = vmatprep.subr.mxu0 0.0
  %1237 = vmatpush1.msra.mxu0 0.0
  %1238 = vmatprep.subr.mxu0 0.0
  %1239 = vmatpush1.msra.mxu0 0.0
  %1240 = vmatprep.subr.mxu0 0.0
  %1241 = vmatpush1.msra.mxu0 0.0
  %1242 = vmatprep.subr.mxu0 0.0
  %1243 = vmatpush1.msra.mxu0 0.0
  %1244 = vmatprep.mubr.f32.mxu0 0.0
  %1245 = vmatmul.mubr.f32.gmra.mrb[0].mxu0 %v1175
  %v1246 = vpop.f32.mrb[0].mxu0
  %v1247 = vadd.f32 0.0, %v1246
  %v1248 = vpop.f32.mrb[0].mxu0
  %1249 = vdwg.mxu0
  %v1250 = vadd.f32 %v1162, %v1247
  %v1251 = vmax.f32 %v1250, 0.0
  %v1252 = vld [vmem:[%s10] sm:$0xff]
  %v1253 = vld [vmem:[%s10 + $0x8] sm:$0xff]
  %v1254 = vld [vmem:[%s10 + $0x10] sm:$0xff]
  %v1255 = vld [vmem:[%s10 + $0x18] sm:$0xff]
  %v1256 = vld [vmem:[%s10 + $0x20] sm:$0xff]
  %v1257 = vld [vmem:[%s10 + $0x28] sm:$0xff]
  %v1258 = vld [vmem:[%s10 + $0x30] sm:$0xff]
  %v1259 = vld [vmem:[%s10 + $0x38] sm:$0xff]
  %v1260 = vld [vmem:[%s11] sm:$0x1]
  %vm1261 = vcmask 523264
  %v1263 = vsel %vm1261, %v1251, 0
  %1265 = vmatprep.subr.mxu0 0.0
  %1266 = vmatpush1.msra.mxu0 %v1252
  %1267 = vmatprep.subr.mxu0 0.0
  %1268 = vmatpush1.msra.mxu0 %v1253
  %1269 = vmatprep.subr.mxu0 0.0
  %1270 = vmatpush1.msra.mxu0 %v1254
  %1271 = vmatprep.subr.mxu0 0.0
  %1272 = vmatpush1.msra.mxu0 %v1255
  %1273 = vmatprep.subr.mxu0 0.0
  %1274 = vmatpush1.msra.mxu0 %v1256
  %1275 = vmatprep.subr.mxu0 0.0
  %1276 = vmatpush1.msra.mxu0 %v1257
  %1277 = vmatprep.subr.mxu0 0.0
  %1278 = vmatpush1.msra.mxu0 %v1258
  %1279 = vmatprep.subr.mxu0 0.0
  %1280 = vmatpush1.msra.mxu0 %v1259
  %1281 = vmatprep.subr.mxu0 0.0
  %1282 = vmatpush1.msra.mxu0 0.0
  %1283 = vmatprep.subr.mxu0 0.0
  %1284 = vmatpush1.msra.mxu0 0.0
  %1285 = vmatprep.subr.mxu0 0.0
  %1286 = vmatpush1.msra.mxu0 0.0
  %1287 = vmatprep.subr.mxu0 0.0
  %1288 = vmatpush1.msra.mxu0 0.0
  %1289 = vmatprep.subr.mxu0 0.0
  %1290 = vmatpush1.msra.mxu0 0.0
  %1291 = vmatprep.subr.mxu0 0.0
  %1292 = vmatpush1.msra.mxu0 0.0
  %1293 = vmatprep.subr.mxu0 0.0
  %1294 = vmatpush1.msra.mxu0 0.0
  %1295 = vmatprep.subr.mxu0 0.0
  %1296 = vmatpush1.msra.mxu0 0.0
  %1297 = vmatprep.subr.mxu0 0.0
  %1298 = vmatpush1.msra.mxu0 0.0
  %1299 = vmatprep.subr.mxu0 0.0
  %1300 = vmatpush1.msra.mxu0 0.0
  %1301 = vmatprep.subr.mxu0 0.0
  %1302 = vmatpush1.msra.mxu0 0.0
  %1303 = vmatprep.subr.mxu0 0.0
  %1304 = vmatpush1.msra.mxu0 0.0
  %1305 = vmatprep.subr.mxu0 0.0
  %1306 = vmatpush1.msra.mxu0 0.0
  %1307 = vmatprep.subr.mxu0 0.0
  %1308 = vmatpush1.msra.mxu0 0.0
  %1309 = vmatprep.subr.mxu0 0.0
  %1310 = vmatpush1.msra.mxu0 0.0
  %1311 = vmatprep.subr.mxu0 0.0
  %1312 = vmatpush1.msra.mxu0 0.0
  %1313 = vmatprep.subr.mxu0 0.0
  %1314 = vmatpush1.msra.mxu0 0.0
  %1315 = vmatprep.subr.mxu0 0.0
  %1316 = vmatpush1.msra.mxu0 0.0
  %1317 = vmatprep.subr.mxu0 0.0
  %1318 = vmatpush1.msra.mxu0 0.0
  %1319 = vmatprep.subr.mxu0 0.0
  %1320 = vmatpush1.msra.mxu0 0.0
  %1321 = vmatprep.subr.mxu0 0.0
  %1322 = vmatpush1.msra.mxu0 0.0
  %1323 = vmatprep.subr.mxu0 0.0
  %1324 = vmatpush1.msra.mxu0 0.0
  %1325 = vmatprep.subr.mxu0 0.0
  %1326 = vmatpush1.msra.mxu0 0.0
  %1327 = vmatprep.subr.mxu0 0.0
  %1328 = vmatpush1.msra.mxu0 0.0
  %1329 = vmatprep.mubr.f32.mxu0 0.0
  %1330 = vmatmul.mubr.f32.gmra.mrb[0].mxu0 %v1263
  %v1331 = vpop.f32.mrb[0].mxu0
  %v1332 = vadd.f32 %v1260, %v1331
  %v1333 = vpop.f32.mrb[0].mxu0
  %1334 = vdwg.mxu0
  %vm1335 = vcmask 155648
  %1336 = vst.msk [vmem:[%s12] sm:$0x1] %vm1335, %v1332
  // Predicated region
  $region50: #{basenet_forward.1} parent=0 // pred_check
    _
  $region51: #{basenet_forward.1} parent=0 // pred_check_branch
    %1338 = sbr.rel (0) target = $region53
  $region52: #{basenet_forward.1} parent=0 // pred_region
    _
  $region53: #{basenet_forward.1} parent=0 // pred_fallthru
    _
  // Predicated region
  $region54: #{basenet_forward.1} parent=0 // pred_check
    _
  $region55: #{basenet_forward.1} parent=0 // pred_check_branch
    %1340 = sbr.rel (0) target = $region57
  $region56: #{basenet_forward.1} parent=0 // pred_region
    _
  $region57: #{basenet_forward.1} parent=0 // pred_fallthru
    _

</llo_original>
